<compile_context>
chip_gen: v7x
topology: tpu7x:2x2x1
jax: 0.10.0
libtpu: 0.0.40
codegen_flags: <defaults>
</compile_context>

<pallas_src>
import functools

import jax
import jax.numpy as jnp
from jax.experimental import pallas as pl
from jax.experimental.pallas import tpu as pltpu


_LANE = 128        # feature dims padded to a multiple of the vreg lane width
_PAD_N = 256       # node count padded to a multiple of this (tile granularity)
_TM_TARGET = 512   # row-tile target (nodes)
_TK_TARGET = 2048  # contraction-tile target along the merged R*N axis


def _round_up(v, m):
    return (v + m - 1) // m * m


def _pad_to(a, shape):
    return jnp.pad(a, [(0, s - d) for d, s in zip(a.shape, shape)])


def _pick_tile(total, target, mult):
    """Largest multiple of `mult` that is <= min(total, target) and divides `total`."""
    t = min(target, total)
    t = max((t // mult) * mult, mult)
    while total % t:
        t -= mult
    return t


# ----------------------------------------------------------------------------
# Kernels
# ----------------------------------------------------------------------------
def _feature_transform_kernel(x_ref, wroot_ref, b_ref, wrel_ref, self_ref, xw_ref):
    """self = x @ W_root + b (f32); xw[r] = x @ W_r (bf16), row-tiled over nodes.

    All matmul operands are bf16 (native MXU path), accumulation f32.  The relation
    weights arrive flattened as [Din_p, R*Dp] so the MXU sees one wide lane-dense
    matmul; per-relation slices (lane-aligned, multiples of 128) are then written into
    the [R, N, Dp] output so the merged-K propagation layout needs no HBM transpose.
    """
    x = x_ref[...]
    self_ref[...] = (
        jnp.dot(x, wroot_ref[...], preferred_element_type=jnp.float32) + b_ref[...]
    )
    xw = jnp.dot(
        x, wrel_ref[...], preferred_element_type=jnp.float32
    ).astype(xw_ref.dtype)
    n_rel, _, dp = xw_ref.shape
    for r in range(n_rel):
        xw_ref[r, :, :] = xw[:, r * dp:(r + 1) * dp]


def _propagate_kernel(*refs, fuse_head):
    """acc = self + A_merged @ XW_merged on a (row_tile i, K tile kk) grid.

    refs (fuse_head=False): a, xw, self, out(h bf16),        acc
    refs (fuse_head=True):  a, xw, self, ow, ob, out(scores), acc
    """
    if fuse_head:
        a_ref, xw_ref, self_ref, ow_ref, ob_ref, out_ref, acc_ref = refs
    else:
        a_ref, xw_ref, self_ref, out_ref, acc_ref = refs

    kk = pl.program_id(1)

    @pl.when(kk == 0)
    def _init():
        acc_ref[...] = self_ref[...]

    # bf16 x bf16 -> f32 accumulation on the MXU.
    acc_ref[...] += jnp.dot(
        a_ref[...], xw_ref[...], preferred_element_type=jnp.float32
    )

    @pl.when(kk == pl.num_programs(1) - 1)
    def _finish():
        h = jnp.maximum(acc_ref[...], 0.0)  # ReLU after each RGCN layer
        if fuse_head:
            # Fused output head: sigmoid(h @ w_out + b_out), (TM, 1) per row tile.
            logits = jnp.sum(h * ow_ref[...], axis=-1, keepdims=True) + ob_ref[...]
            out_ref[...] = jax.nn.sigmoid(logits)
        else:
            out_ref[...] = h.astype(out_ref.dtype)  # bf16 inter-layer hidden state


# ----------------------------------------------------------------------------
# Wrappers
# ----------------------------------------------------------------------------
def feature_transform(x, w_root, bias, w_rel_flat, n_rel, *, tm):
    n_pad, din_p = x.shape
    dp = w_root.shape[1]
    return pl.pallas_call(
        _feature_transform_kernel,
        out_shape=(
            jax.ShapeDtypeStruct((n_pad, dp), jnp.float32),
            jax.ShapeDtypeStruct((n_rel, n_pad, dp), jnp.bfloat16),
        ),
        grid_spec=pltpu.PrefetchScalarGridSpec(
            num_scalar_prefetch=0,
            grid=(n_pad // tm,),
            in_specs=[
                pl.BlockSpec((tm, din_p), lambda i: (i, 0)),
                pl.BlockSpec((din_p, dp), lambda i: (0, 0)),
                pl.BlockSpec((1, dp), lambda i: (0, 0)),
                pl.BlockSpec((din_p, n_rel * dp), lambda i: (0, 0)),
            ],
            out_specs=[
                pl.BlockSpec((tm, dp), lambda i: (i, 0)),
                pl.BlockSpec((n_rel, tm, dp), lambda i: (0, i, 0)),
            ],
        ),
        compiler_params=pltpu.CompilerParams(dimension_semantics=("parallel",)),
    )(x, w_root, bias, w_rel_flat)


def rgcn_propagate(adj_merged, xw_merged, self_term, head=None, *, tm, tk):
    n_pad, k_total = adj_merged.shape
    dp = self_term.shape[1]
    fuse_head = head is not None
    n_i, n_kk = n_pad // tm, k_total // tk

    in_specs = [
        # A tile over the merged [N, R*N] adjacency.
        pl.BlockSpec((tm, tk), lambda i, kk: (i, kk)),
        # Matching XW rows over the merged [R*N, Dp] transformed features.
        pl.BlockSpec((tk, dp), lambda i, kk: (kk, 0)),
        # Self term, resident per row tile.
        pl.BlockSpec((tm, dp), lambda i, kk: (i, 0)),
    ]
    inputs = [adj_merged, xw_merged, self_term]
    if fuse_head:
        out_w, out_b = head
        in_specs += [
            pl.BlockSpec((1, dp), lambda i, kk: (0, 0)),
            pl.BlockSpec((1, 1), lambda i, kk: (0, 0)),
        ]
        inputs += [out_w, out_b]
        out_shape = jax.ShapeDtypeStruct((n_pad, 1), jnp.float32)
        out_spec = pl.BlockSpec((tm, 1), lambda i, kk: (i, 0))
        out_bytes = n_pad * 4
    else:
        out_shape = jax.ShapeDtypeStruct((n_pad, dp), jnp.bfloat16)
        out_spec = pl.BlockSpec((tm, dp), lambda i, kk: (i, 0))
        out_bytes = n_pad * dp * 2

    cost = pl.CostEstimate(
        flops=2 * n_pad * k_total * dp + (2 * n_pad * dp if fuse_head else 0),
        transcendentals=n_pad if fuse_head else 0,
        bytes_accessed=int(
            adj_merged.size * adj_merged.dtype.itemsize
            + n_i * xw_merged.size * xw_merged.dtype.itemsize
            + self_term.size * 4
            + out_bytes
        ),
    )

    return pl.pallas_call(
        functools.partial(_propagate_kernel, fuse_head=fuse_head),
        out_shape=out_shape,
        grid_spec=pltpu.PrefetchScalarGridSpec(
            num_scalar_prefetch=0,
            grid=(n_i, n_kk),
            in_specs=in_specs,
            out_specs=out_spec,
            scratch_shapes=[pltpu.VMEM((tm, dp), jnp.float32)],
        ),
        compiler_params=pltpu.CompilerParams(
            dimension_semantics=("parallel", "arbitrary")
        ),
        cost_estimate=cost,
    )(*inputs)


def build_adjacency_merged(edge_index, edge_type, n_pad, num_relations):
    """Dense normalized adjacency, built directly in the merged [N, R*N] bf16 layout."""
    # TODO(synk): for real (sparse) graphs replace the dense [N, R*N] adjacency with a
    # CSR / scalar-prefetch gather formulation; dense A is O(R*N^2) HBM traffic.
    src = edge_index[0]
    dst = edge_index[1]
    adj = jnp.zeros((n_pad, num_relations, n_pad), jnp.float32)
    adj = adj.at[dst, edge_type, src].add(1.0)
    deg = adj.sum(axis=-1, keepdims=True)      # in-degree per (node, relation)
    adj = adj / jnp.maximum(deg, 1.0)          # mean aggregation (1/deg), exact in f32
    return adj.astype(jnp.bfloat16).reshape(n_pad, num_relations * n_pad)


def preference_propagation_forward(params, x, edge_index, edge_type, num_relations):
    n, din = x.shape
    n_pad = _round_up(n, _PAD_N)
    adj = build_adjacency_merged(edge_index, edge_type, n_pad, num_relations)

    tm_target = _TM_TARGET
    if n_pad >= 2 * _PAD_N:
        # Keep >= 2 row tiles so the "parallel" axis can shard over v7x's 2 TensorCores.
        tm_target = min(tm_target, n_pad // 2)
    tm = _pick_tile(n_pad, tm_target, _PAD_N)
    tk = _pick_tile(num_relations * n_pad, _TK_TARGET, _PAD_N)

    h = _pad_to(x, (n_pad, _round_up(din, _LANE))).astype(jnp.bfloat16)
    num_layers = len(params["layers"])
    for li, (w, w_root, b) in enumerate(params["layers"]):
        n_rel, d_in, d_out = w.shape
        d_in_p = _round_up(d_in, _LANE)
        d_out_p = _round_up(d_out, _LANE)
        assert n_rel == num_relations and d_in_p == h.shape[1]

        # Zero-pad parameters to lane-dense shapes (ghost rows/cols contribute zero);
        # matmul operands are bf16 (native MXU), accumulation stays f32 in-kernel.
        w_root_p = _pad_to(w_root, (d_in_p, d_out_p)).astype(jnp.bfloat16)
        bias_p = _pad_to(b.reshape(1, -1), (1, d_out_p)).astype(jnp.float32)
        w_rel_p = _pad_to(w, (n_rel, d_in_p, d_out_p))                 # [R, Din_p, Dp]
        w_rel_flat = jnp.transpose(w_rel_p, (1, 0, 2)).reshape(
            d_in_p, n_rel * d_out_p).astype(jnp.bfloat16)              # [Din_p, R*Dp]

        self_term, xw = feature_transform(h, w_root_p, bias_p, w_rel_flat, n_rel, tm=tm)
        xw_merged = xw.reshape(n_rel * n_pad, d_out_p)   # contiguous; no HBM transpose

        if li == num_layers - 1:
            out_w = _pad_to(params["out_w"].reshape(1, -1).astype(jnp.float32),
                            (1, d_out_p))
            out_b = params["out_b"].reshape(1, 1).astype(jnp.float32)
            scores = rgcn_propagate(adj, xw_merged, self_term,
                                    head=(out_w, out_b), tm=tm, tk=tk)
            return scores[:n, 0]
        h = rgcn_propagate(adj, xw_merged, self_term, tm=tm, tk=tk)


# ----------------------------------------------------------------------------
# Pure-JAX reference (f32, unpadded) for correctness check
# ----------------------------------------------------------------------------
def reference_forward(params, x, edge_index, edge_type, num_relations):
    n = x.shape[0]
    src, dst = edge_index[0], edge_index[1]
    adj = jnp.zeros((num_relations, n, n), jnp.float32)
    adj = adj.at[edge_type, dst, src].add(1.0)
    deg = adj.sum(axis=-1, keepdims=True)
    adj = adj / jnp.maximum(deg, 1.0)
    h = x
    for (w, w_root, b) in params["layers"]:
        out = h @ w_root + b
        for r in range(num_relations):
            out = out + adj[r] @ (h @ w[r])
        h = jnp.maximum(out, 0.0)
    return jax.nn.sigmoid(
        h @ params["out_w"].reshape(-1, 1) + params["out_b"]
    ).squeeze(-1)


# ----------------------------------------------------------------------------
# Deterministic parameter init
# ----------------------------------------------------------------------------
def init_params(key, input_dim, hidden_dim, num_relations, num_layers=2):
    dims = [input_dim] + [hidden_dim] * num_layers
    layers = []
    for i in range(num_layers):
        key, k1, k2 = jax.random.split(key, 3)
        din, dout = dims[i], dims[i + 1]
        scale = 1.0 / jnp.sqrt(din)
        w = jax.random.normal(k1, (num_relations, din, dout), jnp.float32) * scale
        w_root = jax.random.normal(k2, (din, dout), jnp.float32) * scale
        b = jnp.zeros((dout,), jnp.float32)
        layers.append((w, w_root, b))
    key, k3 = jax.random.split(key)
    out_w = jax.random.normal(k3, (hidden_dim,), jnp.float32) / jnp.sqrt(hidden_dim)
    out_b = jnp.zeros((1,), jnp.float32)
    return {"layers": layers, "out_w": out_w, "out_b": out_b}


# ----------------------------------------------------------------------------
if __name__ == "__main__":
    NUM_NODES = 8
    INPUT_DIM = 16
    HIDDEN_DIM = 32
    NUM_RELATIONS = 3
    NUM_LAYERS = 2
    NUM_EDGES = 24

    key = jax.random.PRNGKey(0)
    key, kx, ks, kd, kt = jax.random.split(key, 5)

    x = jax.random.normal(kx, (NUM_NODES, INPUT_DIM), jnp.float32)
    src = jax.random.randint(ks, (NUM_EDGES,), 0, NUM_NODES)
    dst = jax.random.randint(kd, (NUM_EDGES,), 0, NUM_NODES)
    edge_index = jnp.stack([src, dst], axis=0)                       # [2, E]
    edge_type = jax.random.randint(kt, (NUM_EDGES,), 0, NUM_RELATIONS)

    params = init_params(key, INPUT_DIM, HIDDEN_DIM, NUM_RELATIONS, NUM_LAYERS)

    out = preference_propagation_forward(params, x, edge_index, edge_type, NUM_RELATIONS)
    out = jax.block_until_ready(out)

    ref = reference_forward(params, x, edge_index, edge_type, NUM_RELATIONS)
    assert out.shape == (NUM_NODES,), out.shape
    # bf16 adjacency / features / weights (f32 accumulation) -> looser tolerance than f32.
    assert jnp.allclose(out, ref, atol=3e-2, rtol=3e-2), (out, ref)

    print("KERNEL_OK")
</pallas_src>

<mosaic_0001>
module attributes {stable_mosaic.version = 11 : i64} {
  func.func @_feature_transform_kernel(%arg0: i32, %arg1: memref<256x128xbf16, #tpu.memory_space<vmem>>, %arg2: memref<128x128xbf16, #tpu.memory_space<vmem>>, %arg3: memref<1x128xf32, #tpu.memory_space<vmem>>, %arg4: memref<128x384xbf16, #tpu.memory_space<vmem>>, %arg5: memref<256x128xf32, #tpu.memory_space<vmem>>, %arg6: memref<3x256x128xbf16, #tpu.memory_space<vmem>>) attributes {dimension_semantics = [#tpu.dimension_semantics<parallel>], iteration_bounds = array<i64: 1>, scalar_prefetch = 0 : i64, scratch_operands = 0 : i64, tpu.core_type = #tpu.core_type<tc>, window_params = [{transform_indices = @transform_0, window_bounds = array<i64: 256, 128>}, {pipeline_mode = #tpu.pipeline_mode<synchronous>, transform_indices = @transform_1, window_bounds = array<i64: 128, 128>}, {pipeline_mode = #tpu.pipeline_mode<synchronous>, transform_indices = @transform_2, window_bounds = array<i64: 1, 128>}, {pipeline_mode = #tpu.pipeline_mode<synchronous>, transform_indices = @transform_3, window_bounds = array<i64: 128, 384>}, {transform_indices = @transform_4, window_bounds = array<i64: 256, 128>}, {transform_indices = @transform_5, window_bounds = array<i64: 3, 256, 128>}]} {
    %c0 = arith.constant 0 : index
    %c0_0 = arith.constant 0 : index
    %0 = vector.load %arg1[%c0, %c0_0] : memref<256x128xbf16, #tpu.memory_space<vmem>>, vector<256x128xbf16>
    %c0_1 = arith.constant 0 : index
    %c0_2 = arith.constant 0 : index
    %1 = vector.load %arg2[%c0_1, %c0_2] : memref<128x128xbf16, #tpu.memory_space<vmem>>, vector<128x128xbf16>
    %cst = arith.constant dense<0.000000e+00> : vector<256x128xf32>
    %2 = tpu.matmul %0, %1, %cst {dimension_numbers = #tpu.dot_dimension_numbers<[1], [0], [0], [1], [0, 0, 1, 1], [], []>} : vector<256x128xbf16>, vector<128x128xbf16>, vector<256x128xf32> -> vector<256x128xf32>
    %c0_3 = arith.constant 0 : index
    %c0_4 = arith.constant 0 : index
    %3 = vector.load %arg3[%c0_3, %c0_4] : memref<1x128xf32, #tpu.memory_space<vmem>>, vector<1x128xf32>
    %4 = vector.broadcast %3 : vector<1x128xf32> to vector<256x128xf32>
    %5 = arith.addf %2, %4 : vector<256x128xf32>
    %c0_5 = arith.constant 0 : index
    %c0_6 = arith.constant 0 : index
    %6 = vector.load %arg5[%c0_5, %c0_6] : memref<256x128xf32, #tpu.memory_space<vmem>>, vector<256x128xf32>
    tpu.vector_store %arg5[%c0_5, %c0_6], %5 {strides = array<i32>} : memref<256x128xf32, #tpu.memory_space<vmem>>, vector<256x128xf32>,
    %c0_7 = arith.constant 0 : index
    %c0_8 = arith.constant 0 : index
    %7 = vector.load %arg4[%c0_7, %c0_8] : memref<128x384xbf16, #tpu.memory_space<vmem>>, vector<128x384xbf16>
    %cst_9 = arith.constant dense<0.000000e+00> : vector<256x384xf32>
    %8 = tpu.matmul %0, %7, %cst_9 {dimension_numbers = #tpu.dot_dimension_numbers<[1], [0], [0], [1], [0, 0, 1, 1], [], []>} : vector<256x128xbf16>, vector<128x384xbf16>, vector<256x384xf32> -> vector<256x384xf32>
    %9 = arith.truncf %8 : vector<256x384xf32> to vector<256x384xbf16>
    %10 = vector.extract_strided_slice %9 {offsets = [0, 0], sizes = [256, 128], strides = [1, 1]} : vector<256x384xbf16> to vector<256x128xbf16>
    %c0_10 = arith.constant 0 : index
    %c0_11 = arith.constant 0 : index
    %c0_12 = arith.constant 0 : index
    %11 = vector.load %arg6[%c0_10, %c0_11, %c0_12] : memref<3x256x128xbf16, #tpu.memory_space<vmem>>, vector<1x256x128xbf16>
    %12 = vector.shape_cast %11 : vector<1x256x128xbf16> to vector<256x128xbf16>
    %13 = vector.shape_cast %10 : vector<256x128xbf16> to vector<1x256x128xbf16>
    tpu.vector_store %arg6[%c0_10, %c0_11, %c0_12], %13 {strides = array<i32>} : memref<3x256x128xbf16, #tpu.memory_space<vmem>>, vector<1x256x128xbf16>,
    %14 = vector.extract_strided_slice %9 {offsets = [0, 128], sizes = [256, 128], strides = [1, 1]} : vector<256x384xbf16> to vector<256x128xbf16>
    %c1 = arith.constant 1 : index
    %c0_13 = arith.constant 0 : index
    %c0_14 = arith.constant 0 : index
    %15 = vector.load %arg6[%c1, %c0_13, %c0_14] : memref<3x256x128xbf16, #tpu.memory_space<vmem>>, vector<1x256x128xbf16>
    %16 = vector.shape_cast %15 : vector<1x256x128xbf16> to vector<256x128xbf16>
    %17 = vector.shape_cast %14 : vector<256x128xbf16> to vector<1x256x128xbf16>
    tpu.vector_store %arg6[%c1, %c0_13, %c0_14], %17 {strides = array<i32>} : memref<3x256x128xbf16, #tpu.memory_space<vmem>>, vector<1x256x128xbf16>,
    %18 = vector.extract_strided_slice %9 {offsets = [0, 256], sizes = [256, 128], strides = [1, 1]} : vector<256x384xbf16> to vector<256x128xbf16>
    %c2 = arith.constant 2 : index
    %c0_15 = arith.constant 0 : index
    %c0_16 = arith.constant 0 : index
    %19 = vector.load %arg6[%c2, %c0_15, %c0_16] : memref<3x256x128xbf16, #tpu.memory_space<vmem>>, vector<1x256x128xbf16>
    %20 = vector.shape_cast %19 : vector<1x256x128xbf16> to vector<256x128xbf16>
    %21 = vector.shape_cast %18 : vector<256x128xbf16> to vector<1x256x128xbf16>
    tpu.vector_store %arg6[%c2, %c0_15, %c0_16], %21 {strides = array<i32>} : memref<3x256x128xbf16, #tpu.memory_space<vmem>>, vector<1x256x128xbf16>,
    return
  }
  func.func @transform_0(%arg0: i32) -> (i32, i32) {
    %c0_i32 = arith.constant 0 : i32
    %c0_i32_0 = arith.constant 0 : i32
    return %arg0, %c0_i32 : i32, i32
  }
  func.func @transform_1(%arg0: i32) -> (i32, i32) {
    %c0_i32 = arith.constant 0 : i32
    %c0_i32_0 = arith.constant 0 : i32
    %c0_i32_1 = arith.constant 0 : i32
    return %c0_i32, %c0_i32_0 : i32, i32
  }
  func.func @transform_2(%arg0: i32) -> (i32, i32) {
    %c0_i32 = arith.constant 0 : i32
    %c0_i32_0 = arith.constant 0 : i32
    %c0_i32_1 = arith.constant 0 : i32
    return %c0_i32, %c0_i32_0 : i32, i32
  }
  func.func @transform_3(%arg0: i32) -> (i32, i32) {
    %c0_i32 = arith.constant 0 : i32
    %c0_i32_0 = arith.constant 0 : i32
    %c0_i32_1 = arith.constant 0 : i32
    return %c0_i32, %c0_i32_0 : i32, i32
  }
  func.func @transform_4(%arg0: i32) -> (i32, i32) {
    %c0_i32 = arith.constant 0 : i32
    %c0_i32_0 = arith.constant 0 : i32
    return %arg0, %c0_i32 : i32, i32
  }
  func.func @transform_5(%arg0: i32) -> (i32, i32, i32) {
    %c0_i32 = arith.constant 0 : i32
    %c0_i32_0 = arith.constant 0 : i32
    %c0_i32_1 = arith.constant 0 : i32
    return %c0_i32, %arg0, %c0_i32_0 : i32, i32, i32
  }
}

</mosaic_0001>

<llo_original>
// kernel: tpu_custom_call.1
$region0: #{tpu_custom_call.1}
  #allocation0 [shape = 'u32[]', space=smem, size = 0x4, offset = 0x4, fixed_abs, tag = 'smem constant byte address 0x4 - core index']
  #allocation1 [shape = 'u32[144,128]{1,0:T(1,128)}', space=vmem, size = 0x12000, scoped, tag = 'internal scratch']
  %s0 = inlined_call_operand.hbm [shape: bf16[256,128], index: 0, kind: input, shape index: {}]
  %s1 = inlined_call_operand.hbm [shape: bf16[128,128], index: 1, kind: input, shape index: {}]
  %s2 = inlined_call_operand.vmem [shape: f32[1,128], index: 2, kind: input, shape index: {}]
  %s3 = inlined_call_operand.hbm [shape: bf16[128,384], index: 3, kind: input, shape index: {}]
  %s4 = inlined_call_operand.hbm [shape: f32[256,128], index: 4, kind: output, shape index: {0}]
  %s5 = inlined_call_operand.hbm [shape: bf16[3,256,128], index: 5, kind: output, shape index: {1}]
  %6 = xla_tuple %s4, %s5
  %s7 = sld [smem:[#allocation0]]
  $region46: #{tpu_custom_call.1} parent=0
    _
  %s9 = ssub.s32 1, %s7
  %s10 = scalar_select 0, %s9, %s7
  $region1: #{tpu_custom_call.1} parent=0
    #allocation2 [shape = 'u8[65536]{0}', space=vmem, size = 0x10000, scoped, tag = 'input window, operand 0, single buffered']
    #allocation3 [shape = 's32[1]{0}', space=sflag, size = 0x4, scoped, tag = 'scoped memory for tpu_custom_call.1']
    #allocation4 [shape = 's32[1]{0}', space=sflag, size = 0x4, scoped, tag = 'scoped memory for tpu_custom_call.1']
    #allocation5 [shape = 'u8[32768]{0}', space=vmem, size = 0x8000, scoped, tag = 'input window, operand 1, single buffered']
    #allocation6 [shape = 's32[1]{0}', space=sflag, size = 0x4, scoped, tag = 'scoped memory for tpu_custom_call.1']
    #allocation7 [shape = 'u8[98304]{0}', space=vmem, size = 0x18000, scoped, tag = 'input window, operand 3, single buffered']
    #allocation8 [shape = 'u8[131072]{0}', space=vmem, size = 0x20000, scoped, tag = 'output window, operand 0, single buffered']
    #allocation9 [shape = 'u8[196608]{0}', space=vmem, size = 0x30000, scoped, tag = 'output window, operand 1, single buffered']
    #allocation10 [shape = 's32[1]{0}', space=sflag, size = 0x4, scoped, tag = 'scoped memory for tpu_custom_call.1']
    %11 = vsyncpa [#allocation3], 0
    %12 = vsyncpa [#allocation6], 0
    %13 = vsyncpa [#allocation4], 0
    %14 = vsyncpa [#allocation10], 0
    // Predicated region
    $region2: #{tpu_custom_call.1} parent=1 // pred_check
      _
    $region3: #{tpu_custom_call.1} parent=1 // pred_check_branch
      %16 = sbr.rel (0) target = $region5
    $region4: #{tpu_custom_call.1} parent=1 // pred_region
      %s18 = ssub.s32 2048, 2048
      %19 = vsyncadd [#allocation3], %s18
      %s20 = sshll.u32 [#allocation2], 4
      %s21 = int_to_ptr.vmem [resolvable:$true] %s20
      %26 = dma.hbm_to_vmem [thread:$0]  %s0, 2048, %s21, [#allocation3], 64, 64, 4
    $region5: #{tpu_custom_call.1} parent=1 // pred_fallthru
      _
    // Predicated region
    $region6: #{tpu_custom_call.1} parent=1 // pred_check
      _
    $region7: #{tpu_custom_call.1} parent=1 // pred_check_branch
      %28 = sbr.rel (0) target = $region9
    $region8: #{tpu_custom_call.1} parent=1 // pred_region
      %s30 = ssub.s32 1024, 1024
      %31 = vsyncadd [#allocation6], %s30
      %s32 = sshll.u32 [#allocation5], 4
      %s33 = int_to_ptr.vmem [resolvable:$true] %s32
      %38 = dma.hbm_to_vmem [thread:$0]  %s1, 1024, %s33, [#allocation6], 64, 64, 4
    $region9: #{tpu_custom_call.1} parent=1 // pred_fallthru
      _
    // Predicated region
    $region10: #{tpu_custom_call.1} parent=1 // pred_check
      _
    $region11: #{tpu_custom_call.1} parent=1 // pred_check_branch
      %40 = sbr.rel (0) target = $region13
    $region12: #{tpu_custom_call.1} parent=1 // pred_region
      _
    $region13: #{tpu_custom_call.1} parent=1 // pred_fallthru
      _
    // Predicated region
    $region14: #{tpu_custom_call.1} parent=1 // pred_check
      _
    $region15: #{tpu_custom_call.1} parent=1 // pred_check_branch
      %42 = sbr.rel (0) target = $region17
    $region16: #{tpu_custom_call.1} parent=1 // pred_region
      %s44 = ssub.s32 3072, 3072
      %45 = vsyncadd [#allocation6], %s44
      %s46 = sshll.u32 [#allocation7], 4
      %s47 = int_to_ptr.vmem [resolvable:$true] %s46
      %52 = dma.hbm_to_vmem [thread:$0]  %s3, 3072, %s47, [#allocation6], 192, 192, 12
    $region17: #{tpu_custom_call.1} parent=1 // pred_fallthru
      _
    // Predicated region
    $region18: #{tpu_custom_call.1} parent=1 // pred_check
      _
    $region19: #{tpu_custom_call.1} parent=1 // pred_check_branch
      %54 = sbr.rel (0) target = $region21
    $region20: #{tpu_custom_call.1} parent=1 // pred_region
      %55 = dma.done [#allocation3], 2048
    $region21: #{tpu_custom_call.1} parent=1 // pred_fallthru
      _
    // Predicated region
    $region22: #{tpu_custom_call.1} parent=1 // pred_check
      _
    $region23: #{tpu_custom_call.1} parent=1 // pred_check_branch
      %57 = sbr.rel (0) target = $region25
    $region24: #{tpu_custom_call.1} parent=1 // pred_region
      %58 = dma.done [#allocation6], 1024
    $region25: #{tpu_custom_call.1} parent=1 // pred_fallthru
      _
    // Predicated region
    $region26: #{tpu_custom_call.1} parent=1 // pred_check
      _
    $region27: #{tpu_custom_call.1} parent=1 // pred_check_branch
      %60 = sbr.rel (0) target = $region29
    $region28: #{tpu_custom_call.1} parent=1 // pred_region
      %61 = dma.done [#allocation6], 3072
    $region29: #{tpu_custom_call.1} parent=1 // pred_fallthru
      _
    %v63 = vld [vmem:[#allocation2] sm:$0xf]
    %v64 = vld [vmem:[#allocation2 + $0x4] sm:$0xf]
    %v65 = vld [vmem:[#allocation2 + $0x8] sm:$0xf]
    %v66 = vld [vmem:[#allocation2 + $0xc] sm:$0xf]
    %v67 = vld [vmem:[#allocation2 + $0x10] sm:$0xf]
    %v68 = vld [vmem:[#allocation2 + $0x14] sm:$0xf]
    %v69 = vld [vmem:[#allocation2 + $0x18] sm:$0xf]
    %v70 = vld [vmem:[#allocation2 + $0x1c] sm:$0xf]
    %v71 = vld [vmem:[#allocation2 + $0x20] sm:$0xf]
    %v72 = vld [vmem:[#allocation2 + $0x24] sm:$0xf]
    %v73 = vld [vmem:[#allocation2 + $0x28] sm:$0xf]
    %v74 = vld [vmem:[#allocation2 + $0x2c] sm:$0xf]
    %v75 = vld [vmem:[#allocation2 + $0x30] sm:$0xf]
    %v76 = vld [vmem:[#allocation2 + $0x34] sm:$0xf]
    %v77 = vld [vmem:[#allocation2 + $0x38] sm:$0xf]
    %v78 = vld [vmem:[#allocation2 + $0x3c] sm:$0xf]
    %v79 = vld [vmem:[#allocation2 + $0x40] sm:$0xf]
    %v80 = vld [vmem:[#allocation2 + $0x44] sm:$0xf]
    %v81 = vld [vmem:[#allocation2 + $0x48] sm:$0xf]
    %v82 = vld [vmem:[#allocation2 + $0x4c] sm:$0xf]
    %v83 = vld [vmem:[#allocation2 + $0x50] sm:$0xf]
    %v84 = vld [vmem:[#allocation2 + $0x54] sm:$0xf]
    %v85 = vld [vmem:[#allocation2 + $0x58] sm:$0xf]
    %v86 = vld [vmem:[#allocation2 + $0x5c] sm:$0xf]
    %v87 = vld [vmem:[#allocation2 + $0x60] sm:$0xf]
    %v88 = vld [vmem:[#allocation2 + $0x64] sm:$0xf]
    %v89 = vld [vmem:[#allocation2 + $0x68] sm:$0xf]
    %v90 = vld [vmem:[#allocation2 + $0x6c] sm:$0xf]
    %v91 = vld [vmem:[#allocation2 + $0x70] sm:$0xf]
    %v92 = vld [vmem:[#allocation2 + $0x74] sm:$0xf]
    %v93 = vld [vmem:[#allocation2 + $0x78] sm:$0xf]
    %v94 = vld [vmem:[#allocation2 + $0x7c] sm:$0xf]
    %v95 = vld [vmem:[#allocation5] sm:$0xf]
    %v96 = vld [vmem:[#allocation5 + $0x4] sm:$0xf]
    %v97 = vld [vmem:[#allocation5 + $0x8] sm:$0xf]
    %v98 = vld [vmem:[#allocation5 + $0xc] sm:$0xf]
    %v99 = vld [vmem:[#allocation5 + $0x10] sm:$0xf]
    %v100 = vld [vmem:[#allocation5 + $0x14] sm:$0xf]
    %v101 = vld [vmem:[#allocation5 + $0x18] sm:$0xf]
    %v102 = vld [vmem:[#allocation5 + $0x1c] sm:$0xf]
    %v103 = vld [vmem:[#allocation5 + $0x20] sm:$0xf]
    %v104 = vld [vmem:[#allocation5 + $0x24] sm:$0xf]
    %v105 = vld [vmem:[#allocation5 + $0x28] sm:$0xf]
    %v106 = vld [vmem:[#allocation5 + $0x2c] sm:$0xf]
    %v107 = vld [vmem:[#allocation5 + $0x30] sm:$0xf]
    %v108 = vld [vmem:[#allocation5 + $0x34] sm:$0xf]
    %v109 = vld [vmem:[#allocation5 + $0x38] sm:$0xf]
    %v110 = vld [vmem:[#allocation5 + $0x3c] sm:$0xf]
    %v111 = vld [vmem:[%s2] sm:$0x1]
    %v113 = vlaneseq
    %v114 = vshrl.u32 %v113, 7
    %v115 = vsub.s32 0, %v114
    %v116 = vrot.slane %v111, %v115
    %v150 = vunpack.c.l.b16 %v63
    %v151 = vunpack.c.l.b16 %v64
    %v152 = vunpack.c.l.b16 %v65
    %v153 = vunpack.c.l.b16 %v66
    %v154 = vunpack.c.l.b16 %v67
    %v155 = vunpack.c.l.b16 %v68
    %v156 = vunpack.c.l.b16 %v69
    %v157 = vunpack.c.l.b16 %v70
    %v158 = vunpack.c.l.b16 %v71
    %v159 = vunpack.c.l.b16 %v72
    %v160 = vunpack.c.l.b16 %v73
    %v161 = vunpack.c.l.b16 %v74
    %v162 = vunpack.c.l.b16 %v75
    %v163 = vunpack.c.l.b16 %v76
    %v164 = vunpack.c.l.b16 %v77
    %v165 = vunpack.c.l.b16 %v78
    %v166 = vunpack.c.l.b16 %v79
    %v167 = vunpack.c.l.b16 %v80
    %v168 = vunpack.c.l.b16 %v81
    %v169 = vunpack.c.l.b16 %v82
    %v170 = vunpack.c.l.b16 %v83
    %v171 = vunpack.c.l.b16 %v84
    %v172 = vunpack.c.l.b16 %v85
    %v173 = vunpack.c.l.b16 %v86
    %v174 = vunpack.c.l.b16 %v87
    %v175 = vunpack.c.l.b16 %v88
    %v176 = vunpack.c.l.b16 %v89
    %v177 = vunpack.c.l.b16 %v90
    %v178 = vunpack.c.l.b16 %v91
    %v179 = vunpack.c.l.b16 %v92
    %v180 = vunpack.c.l.b16 %v93
    %v181 = vunpack.c.l.b16 %v94
    %v182 = vpack.c.b16 %v151, %v150
    %v183 = vpack.c.b16 %v153, %v152
    %v184 = vpack.c.b16 %v155, %v154
    %v185 = vpack.c.b16 %v157, %v156
    %v186 = vpack.c.b16 %v159, %v158
    %v187 = vpack.c.b16 %v161, %v160
    %v188 = vpack.c.b16 %v163, %v162
    %v189 = vpack.c.b16 %v165, %v164
    %v190 = vpack.c.b16 %v167, %v166
    %v191 = vpack.c.b16 %v169, %v168
    %v192 = vpack.c.b16 %v171, %v170
    %v193 = vpack.c.b16 %v173, %v172
    %v194 = vpack.c.b16 %v175, %v174
    %v195 = vpack.c.b16 %v177, %v176
    %v196 = vpack.c.b16 %v179, %v178
    %v197 = vpack.c.b16 %v181, %v180
    %v230 = vunpack.c.l.b16 %v95
    %v231 = vunpack.c.l.b16 %v96
    %v232 = vunpack.c.l.b16 %v97
    %v233 = vunpack.c.l.b16 %v98
    %v234 = vunpack.c.l.b16 %v99
    %v235 = vunpack.c.l.b16 %v100
    %v236 = vunpack.c.l.b16 %v101
    %v237 = vunpack.c.l.b16 %v102
    %v238 = vunpack.c.l.b16 %v103
    %v239 = vunpack.c.l.b16 %v104
    %v240 = vunpack.c.l.b16 %v105
    %v241 = vunpack.c.l.b16 %v106
    %v242 = vunpack.c.l.b16 %v107
    %v243 = vunpack.c.l.b16 %v108
    %v244 = vunpack.c.l.b16 %v109
    %v245 = vunpack.c.l.b16 %v110
    %v246 = vpack.c.b16 %v231, %v230
    %v247 = vpack.c.b16 %v233, %v232
    %v248 = vpack.c.b16 %v235, %v234
    %v249 = vpack.c.b16 %v237, %v236
    %v250 = vpack.c.b16 %v239, %v238
    %v251 = vpack.c.b16 %v241, %v240
    %v252 = vpack.c.b16 %v243, %v242
    %v253 = vpack.c.b16 %v245, %v244
    %262 = vmatprep.subr.bf16.mxu0 0
    %263 = vmatpush1.bf16.msra.mxu0 %v246
    %264 = vmatprep.subr.bf16.mxu0 0
    %265 = vmatpush1.bf16.msra.mxu0 %v247
    %266 = vmatprep.subr.bf16.mxu0 0
    %267 = vmatpush1.bf16.msra.mxu0 %v248
    %268 = vmatprep.subr.bf16.mxu0 0
    %269 = vmatpush1.bf16.msra.mxu0 %v249
    %270 = vmatprep.subr.bf16.mxu0 0
    %271 = vmatpush1.bf16.msra.mxu0 %v250
    %272 = vmatprep.subr.bf16.mxu0 0
    %273 = vmatpush1.bf16.msra.mxu0 %v251
    %274 = vmatprep.subr.bf16.mxu0 0
    %275 = vmatpush1.bf16.msra.mxu0 %v252
    %276 = vmatprep.subr.bf16.mxu0 0
    %277 = vmatpush1.bf16.msra.mxu0 %v253
    %278 = vmatprep.subr.bf16.mxu0 0
    %279 = vmatpush1.bf16.msra.mxu0 0
    %280 = vmatprep.subr.bf16.mxu0 0
    %281 = vmatpush1.bf16.msra.mxu0 0
    %282 = vmatprep.subr.bf16.mxu0 0
    %283 = vmatpush1.bf16.msra.mxu0 0
    %284 = vmatprep.subr.bf16.mxu0 0
    %285 = vmatpush1.bf16.msra.mxu0 0
    %286 = vmatprep.subr.bf16.mxu0 0
    %287 = vmatpush1.bf16.msra.mxu0 0
    %288 = vmatprep.subr.bf16.mxu0 0
    %289 = vmatpush1.bf16.msra.mxu0 0
    %290 = vmatprep.subr.bf16.mxu0 0
    %291 = vmatpush1.bf16.msra.mxu0 0
    %292 = vmatprep.subr.bf16.mxu0 0
    %293 = vmatpush1.bf16.msra.mxu0 0
    %294 = vmatprep.mubr.bf16.mxu0 0
    %295 = vmatmul.mubr.bf16.gmra.mrb[0].mxu0 %v182
    %v296 = vpop.f32.mrb[0].mxu0
    %v297 = vadd.f32 %v116, %v296
    %v298 = vpop.f32.mrb[0].mxu0
    %v299 = vpop.f32.mrb[0].mxu0
    %v300 = vadd.f32 %v116, %v299
    %v301 = vpop.f32.mrb[0].mxu0
    %302 = vmatprep.mubr.bf16.mxu0 0
    %303 = vmatmul.mubr.bf16.gmra.mrb[0].mxu0 %v183
    %v304 = vpop.f32.mrb[0].mxu0
    %v305 = vadd.f32 %v116, %v304
    %v306 = vpop.f32.mrb[0].mxu0
    %v307 = vpop.f32.mrb[0].mxu0
    %v308 = vadd.f32 %v116, %v307
    %v309 = vpop.f32.mrb[0].mxu0
    %310 = vmatprep.mubr.bf16.mxu0 0
    %311 = vmatmul.mubr.bf16.gmra.mrb[0].mxu0 %v184
    %v312 = vpop.f32.mrb[0].mxu0
    %v313 = vadd.f32 %v116, %v312
    %v314 = vpop.f32.mrb[0].mxu0
    %v315 = vpop.f32.mrb[0].mxu0
    %v316 = vadd.f32 %v116, %v315
    %v317 = vpop.f32.mrb[0].mxu0
    %318 = vmatprep.mubr.bf16.mxu0 0
    %319 = vmatmul.mubr.bf16.gmra.mrb[0].mxu0 %v185
    %v320 = vpop.f32.mrb[0].mxu0
    %v321 = vadd.f32 %v116, %v320
    %v322 = vpop.f32.mrb[0].mxu0
    %v323 = vpop.f32.mrb[0].mxu0
    %v324 = vadd.f32 %v116, %v323
    %v325 = vpop.f32.mrb[0].mxu0
    %326 = vmatprep.mubr.bf16.mxu0 0
    %327 = vmatmul.mubr.bf16.gmra.mrb[0].mxu0 %v186
    %v328 = vpop.f32.mrb[0].mxu0
    %v329 = vadd.f32 %v116, %v328
    %v330 = vpop.f32.mrb[0].mxu0
    %v331 = vpop.f32.mrb[0].mxu0
    %v332 = vadd.f32 %v116, %v331
    %v333 = vpop.f32.mrb[0].mxu0
    %334 = vmatprep.mubr.bf16.mxu0 0
    %335 = vmatmul.mubr.bf16.gmra.mrb[0].mxu0 %v187
    %v336 = vpop.f32.mrb[0].mxu0
    %v337 = vadd.f32 %v116, %v336
    %v338 = vpop.f32.mrb[0].mxu0
    %v339 = vpop.f32.mrb[0].mxu0
    %v340 = vadd.f32 %v116, %v339
    %v341 = vpop.f32.mrb[0].mxu0
    %342 = vmatprep.mubr.bf16.mxu0 0
    %343 = vmatmul.mubr.bf16.gmra.mrb[0].mxu0 %v188
    %v344 = vpop.f32.mrb[0].mxu0
    %v345 = vadd.f32 %v116, %v344
    %v346 = vpop.f32.mrb[0].mxu0
    %v347 = vpop.f32.mrb[0].mxu0
    %v348 = vadd.f32 %v116, %v347
    %v349 = vpop.f32.mrb[0].mxu0
    %350 = vmatprep.mubr.bf16.mxu0 0
    %351 = vmatmul.mubr.bf16.gmra.mrb[0].mxu0 %v189
    %v352 = vpop.f32.mrb[0].mxu0
    %v353 = vadd.f32 %v116, %v352
    %v354 = vpop.f32.mrb[0].mxu0
    %v355 = vpop.f32.mrb[0].mxu0
    %v356 = vadd.f32 %v116, %v355
    %v357 = vpop.f32.mrb[0].mxu0
    %358 = vmatprep.mubr.bf16.mxu0 0
    %359 = vmatmul.mubr.bf16.gmra.mrb[0].mxu0 %v190
    %v360 = vpop.f32.mrb[0].mxu0
    %v361 = vadd.f32 %v116, %v360
    %v362 = vpop.f32.mrb[0].mxu0
    %v363 = vpop.f32.mrb[0].mxu0
    %v364 = vadd.f32 %v116, %v363
    %v365 = vpop.f32.mrb[0].mxu0
    %366 = vmatprep.mubr.bf16.mxu0 0
    %367 = vmatmul.mubr.bf16.gmra.mrb[0].mxu0 %v191
    %v368 = vpop.f32.mrb[0].mxu0
    %v369 = vadd.f32 %v116, %v368
    %v370 = vpop.f32.mrb[0].mxu0
    %v371 = vpop.f32.mrb[0].mxu0
    %v372 = vadd.f32 %v116, %v371
    %v373 = vpop.f32.mrb[0].mxu0
    %374 = vmatprep.mubr.bf16.mxu0 0
    %375 = vmatmul.mubr.bf16.gmra.mrb[0].mxu0 %v192
    %v376 = vpop.f32.mrb[0].mxu0
    %v377 = vadd.f32 %v116, %v376
    %v378 = vpop.f32.mrb[0].mxu0
    %v379 = vpop.f32.mrb[0].mxu0
    %v380 = vadd.f32 %v116, %v379
    %v381 = vpop.f32.mrb[0].mxu0
    %382 = vmatprep.mubr.bf16.mxu0 0
    %383 = vmatmul.mubr.bf16.gmra.mrb[0].mxu0 %v193
    %v384 = vpop.f32.mrb[0].mxu0
    %v385 = vadd.f32 %v116, %v384
    %v386 = vpop.f32.mrb[0].mxu0
    %v387 = vpop.f32.mrb[0].mxu0
    %v388 = vadd.f32 %v116, %v387
    %v389 = vpop.f32.mrb[0].mxu0
    %390 = vmatprep.mubr.bf16.mxu0 0
    %391 = vmatmul.mubr.bf16.gmra.mrb[0].mxu0 %v194
    %v392 = vpop.f32.mrb[0].mxu0
    %v393 = vadd.f32 %v116, %v392
    %v394 = vpop.f32.mrb[0].mxu0
    %v395 = vpop.f32.mrb[0].mxu0
    %v396 = vadd.f32 %v116, %v395
    %v397 = vpop.f32.mrb[0].mxu0
    %398 = vmatprep.mubr.bf16.mxu0 0
    %399 = vmatmul.mubr.bf16.gmra.mrb[0].mxu0 %v195
    %v400 = vpop.f32.mrb[0].mxu0
    %v401 = vadd.f32 %v116, %v400
    %v402 = vpop.f32.mrb[0].mxu0
    %v403 = vpop.f32.mrb[0].mxu0
    %v404 = vadd.f32 %v116, %v403
    %v405 = vpop.f32.mrb[0].mxu0
    %406 = vmatprep.mubr.bf16.mxu0 0
    %407 = vmatmul.mubr.bf16.gmra.mrb[0].mxu0 %v196
    %v408 = vpop.f32.mrb[0].mxu0
    %v409 = vadd.f32 %v116, %v408
    %v410 = vpop.f32.mrb[0].mxu0
    %v411 = vpop.f32.mrb[0].mxu0
    %v412 = vadd.f32 %v116, %v411
    %v413 = vpop.f32.mrb[0].mxu0
    %414 = vmatprep.mubr.bf16.mxu0 0
    %415 = vmatmul.mubr.bf16.gmra.mrb[0].mxu0 %v197
    %v416 = vpop.f32.mrb[0].mxu0
    %v417 = vadd.f32 %v116, %v416
    %v418 = vpop.f32.mrb[0].mxu0
    %v419 = vpop.f32.mrb[0].mxu0
    %v420 = vadd.f32 %v116, %v419
    %v421 = vpop.f32.mrb[0].mxu0
    %422 = vdwg.mxu0
    %423 = vst [vmem:[#allocation8] sm:$0xff] %v297
    %424 = vst [vmem:[#allocation8 + $0x8] sm:$0xff] %v300
    %425 = vst [vmem:[#allocation8 + $0x10] sm:$0xff] %v305
    %426 = vst [vmem:[#allocation8 + $0x18] sm:$0xff] %v308
    %427 = vst [vmem:[#allocation8 + $0x20] sm:$0xff] %v313
    %428 = vst [vmem:[#allocation8 + $0x28] sm:$0xff] %v316
    %429 = vst [vmem:[#allocation8 + $0x30] sm:$0xff] %v321
    %430 = vst [vmem:[#allocation8 + $0x38] sm:$0xff] %v324
    %431 = vst [vmem:[#allocation8 + $0x40] sm:$0xff] %v329
    %432 = vst [vmem:[#allocation8 + $0x48] sm:$0xff] %v332
    %433 = vst [vmem:[#allocation8 + $0x50] sm:$0xff] %v337
    %434 = vst [vmem:[#allocation8 + $0x58] sm:$0xff] %v340
    %435 = vst [vmem:[#allocation8 + $0x60] sm:$0xff] %v345
    %436 = vst [vmem:[#allocation8 + $0x68] sm:$0xff] %v348
    %437 = vst [vmem:[#allocation8 + $0x70] sm:$0xff] %v353
    %438 = vst [vmem:[#allocation8 + $0x78] sm:$0xff] %v356
    %439 = vst [vmem:[#allocation8 + $0x80] sm:$0xff] %v361
    %440 = vst [vmem:[#allocation8 + $0x88] sm:$0xff] %v364
    %441 = vst [vmem:[#allocation8 + $0x90] sm:$0xff] %v369
    %442 = vst [vmem:[#allocation8 + $0x98] sm:$0xff] %v372
    %443 = vst [vmem:[#allocation8 + $0xa0] sm:$0xff] %v377
    %444 = vst [vmem:[#allocation8 + $0xa8] sm:$0xff] %v380
    %445 = vst [vmem:[#allocation8 + $0xb0] sm:$0xff] %v385
    %446 = vst [vmem:[#allocation8 + $0xb8] sm:$0xff] %v388
    %447 = vst [vmem:[#allocation8 + $0xc0] sm:$0xff] %v393
    %448 = vst [vmem:[#allocation8 + $0xc8] sm:$0xff] %v396
    %449 = vst [vmem:[#allocation8 + $0xd0] sm:$0xff] %v401
    %450 = vst [vmem:[#allocation8 + $0xd8] sm:$0xff] %v404
    %451 = vst [vmem:[#allocation8 + $0xe0] sm:$0xff] %v409
    %452 = vst [vmem:[#allocation8 + $0xe8] sm:$0xff] %v412
    %453 = vst [vmem:[#allocation8 + $0xf0] sm:$0xff] %v417
    %454 = vst [vmem:[#allocation8 + $0xf8] sm:$0xff] %v420
    %v455 = vld [vmem:[#allocation7] sm:$0xff]
    %v456 = vld [vmem:[#allocation7 + $0x8] sm:$0xf]
    %v457 = vld [vmem:[#allocation7 + $0xc] sm:$0xff]
    %v458 = vld [vmem:[#allocation7 + $0x14] sm:$0xf]
    %v459 = vld [vmem:[#allocation7 + $0x18] sm:$0xff]
    %v460 = vld [vmem:[#allocation7 + $0x20] sm:$0xf]
    %v461 = vld [vmem:[#allocation7 + $0x24] sm:$0xff]
    %v462 = vld [vmem:[#allocation7 + $0x2c] sm:$0xf]
    %v463 = vld [vmem:[#allocation7 + $0x30] sm:$0xff]
    %v464 = vld [vmem:[#allocation7 + $0x38] sm:$0xf]
    %v465 = vld [vmem:[#allocation7 + $0x3c] sm:$0xff]
    %v466 = vld [vmem:[#allocation7 + $0x44] sm:$0xf]
    %v467 = vld [vmem:[#allocation7 + $0x48] sm:$0xff]
    %v468 = vld [vmem:[#allocation7 + $0x50] sm:$0xf]
    %v469 = vld [vmem:[#allocation7 + $0x54] sm:$0xff]
    %v470 = vld [vmem:[#allocation7 + $0x5c] sm:$0xf]
    %v471 = vld [vmem:[#allocation7 + $0x60] sm:$0xff]
    %v472 = vld [vmem:[#allocation7 + $0x68] sm:$0xf]
    %v473 = vld [vmem:[#allocation7 + $0x6c] sm:$0xff]
    %v474 = vld [vmem:[#allocation7 + $0x74] sm:$0xf]
    %v475 = vld [vmem:[#allocation7 + $0x78] sm:$0xff]
    %v476 = vld [vmem:[#allocation7 + $0x80] sm:$0xf]
    %v477 = vld [vmem:[#allocation7 + $0x84] sm:$0xff]
    %v478 = vld [vmem:[#allocation7 + $0x8c] sm:$0xf]
    %v479 = vld [vmem:[#allocation7 + $0x90] sm:$0xff]
    %v480 = vld [vmem:[#allocation7 + $0x98] sm:$0xf]
    %v481 = vld [vmem:[#allocation7 + $0x9c] sm:$0xff]
    %v482 = vld [vmem:[#allocation7 + $0xa4] sm:$0xf]
    %v483 = vld [vmem:[#allocation7 + $0xa8] sm:$0xff]
    %v484 = vld [vmem:[#allocation7 + $0xb0] sm:$0xf]
    %v485 = vld [vmem:[#allocation7 + $0xb4] sm:$0xff]
    %v486 = vld [vmem:[#allocation7 + $0xbc] sm:$0xf]
    %v519 = vunpack.c.l.b16 %v455
    %v520 = vunpack.c.h.b16 %v455
    %v521 = vunpack.c.l.b16 %v456
    %v522 = vunpack.c.l.b16 %v457
    %v523 = vunpack.c.h.b16 %v457
    %v524 = vunpack.c.l.b16 %v458
    %v525 = vunpack.c.l.b16 %v459
    %v526 = vunpack.c.h.b16 %v459
    %v527 = vunpack.c.l.b16 %v460
    %v528 = vunpack.c.l.b16 %v461
    %v529 = vunpack.c.h.b16 %v461
    %v530 = vunpack.c.l.b16 %v462
    %v531 = vunpack.c.l.b16 %v463
    %v532 = vunpack.c.h.b16 %v463
    %v533 = vunpack.c.l.b16 %v464
    %v534 = vunpack.c.l.b16 %v465
    %v535 = vunpack.c.h.b16 %v465
    %v536 = vunpack.c.l.b16 %v466
    %v537 = vunpack.c.l.b16 %v467
    %v538 = vunpack.c.h.b16 %v467
    %v539 = vunpack.c.l.b16 %v468
    %v540 = vunpack.c.l.b16 %v469
    %v541 = vunpack.c.h.b16 %v469
    %v542 = vunpack.c.l.b16 %v470
    %v543 = vunpack.c.l.b16 %v471
    %v544 = vunpack.c.h.b16 %v471
    %v545 = vunpack.c.l.b16 %v472
    %v546 = vunpack.c.l.b16 %v473
    %v547 = vunpack.c.h.b16 %v473
    %v548 = vunpack.c.l.b16 %v474
    %v549 = vunpack.c.l.b16 %v475
    %v550 = vunpack.c.h.b16 %v475
    %v551 = vunpack.c.l.b16 %v476
    %v552 = vunpack.c.l.b16 %v477
    %v553 = vunpack.c.h.b16 %v477
    %v554 = vunpack.c.l.b16 %v478
    %v555 = vunpack.c.l.b16 %v479
    %v556 = vunpack.c.h.b16 %v479
    %v557 = vunpack.c.l.b16 %v480
    %v558 = vunpack.c.l.b16 %v481
    %v559 = vunpack.c.h.b16 %v481
    %v560 = vunpack.c.l.b16 %v482
    %v561 = vunpack.c.l.b16 %v483
    %v562 = vunpack.c.h.b16 %v483
    %v563 = vunpack.c.l.b16 %v484
    %v564 = vunpack.c.l.b16 %v485
    %v565 = vunpack.c.h.b16 %v485
    %v566 = vunpack.c.l.b16 %v486
    %v567 = vpack.c.b16 %v522, %v519
    %v568 = vpack.c.b16 %v523, %v520
    %v569 = vpack.c.b16 %v524, %v521
    %v570 = vpack.c.b16 %v528, %v525
    %v571 = vpack.c.b16 %v529, %v526
    %v572 = vpack.c.b16 %v530, %v527
    %v573 = vpack.c.b16 %v534, %v531
    %v574 = vpack.c.b16 %v535, %v532
    %v575 = vpack.c.b16 %v536, %v533
    %v576 = vpack.c.b16 %v540, %v537
    %v577 = vpack.c.b16 %v541, %v538
    %v578 = vpack.c.b16 %v542, %v539
    %v579 = vpack.c.b16 %v546, %v543
    %v580 = vpack.c.b16 %v547, %v544
    %v581 = vpack.c.b16 %v548, %v545
    %v582 = vpack.c.b16 %v552, %v549
    %v583 = vpack.c.b16 %v553, %v550
    %v584 = vpack.c.b16 %v554, %v551
    %v585 = vpack.c.b16 %v558, %v555
    %v586 = vpack.c.b16 %v559, %v556
    %v587 = vpack.c.b16 %v560, %v557
    %v588 = vpack.c.b16 %v564, %v561
    %v589 = vpack.c.b16 %v565, %v562
    %v590 = vpack.c.b16 %v566, %v563
    %615 = vmatprep.subr.bf16.mxu0 %v568
    %616 = vmatpush1.bf16.msra.mxu0 %v567
    %617 = vmatprep.subr.bf16.mxu0 %v571
    %618 = vmatpush1.bf16.msra.mxu0 %v570
    %619 = vmatprep.subr.bf16.mxu0 %v574
    %620 = vmatpush1.bf16.msra.mxu0 %v573
    %621 = vmatprep.subr.bf16.mxu0 %v577
    %622 = vmatpush1.bf16.msra.mxu0 %v576
    %623 = vmatprep.subr.bf16.mxu0 %v580
    %624 = vmatpush1.bf16.msra.mxu0 %v579
    %625 = vmatprep.subr.bf16.mxu0 %v583
    %626 = vmatpush1.bf16.msra.mxu0 %v582
    %627 = vmatprep.subr.bf16.mxu0 %v586
    %628 = vmatpush1.bf16.msra.mxu0 %v585
    %629 = vmatprep.subr.bf16.mxu0 %v589
    %630 = vmatpush1.bf16.msra.mxu0 %v588
    %631 = vmatprep.subr.bf16.mxu0 0
    %632 = vmatpush1.bf16.msra.mxu0 0
    %633 = vmatprep.subr.bf16.mxu0 0
    %634 = vmatpush1.bf16.msra.mxu0 0
    %635 = vmatprep.subr.bf16.mxu0 0
    %636 = vmatpush1.bf16.msra.mxu0 0
    %637 = vmatprep.subr.bf16.mxu0 0
    %638 = vmatpush1.bf16.msra.mxu0 0
    %639 = vmatprep.subr.bf16.mxu0 0
    %640 = vmatpush1.bf16.msra.mxu0 0
    %641 = vmatprep.subr.bf16.mxu0 0
    %642 = vmatpush1.bf16.msra.mxu0 0
    %643 = vmatprep.subr.bf16.mxu0 0
    %644 = vmatpush1.bf16.msra.mxu0 0
    %645 = vmatprep.subr.bf16.mxu0 0
    %646 = vmatpush1.bf16.msra.mxu0 0
    %647 = vmatprep.mubr.bf16.mxu0 0
    %648 = vmatmul.mubr.bf16.gmra.mrb[0].mxu0 %v182
    %v649 = vpop.f32.mrb[0].mxu0
    %v650 = vadd.f32 0.0, %v649
    %v651 = vpop.f32.mrb[0].mxu0
    %v652 = vadd.f32 0.0, %v651
    %v653 = vpop.f32.mrb[0].mxu0
    %v654 = vadd.f32 0.0, %v653
    %v655 = vpop.f32.mrb[0].mxu0
    %v656 = vadd.f32 0.0, %v655
    %657 = vmatprep.mubr.bf16.mxu0 0
    %658 = vmatmul.mubr.bf16.gmra.mrb[0].mxu0 %v183
    %v659 = vpop.f32.mrb[0].mxu0
    %v660 = vadd.f32 0.0, %v659
    %v661 = vpop.f32.mrb[0].mxu0
    %v662 = vadd.f32 0.0, %v661
    %v663 = vpop.f32.mrb[0].mxu0
    %v664 = vadd.f32 0.0, %v663
    %v665 = vpop.f32.mrb[0].mxu0
    %v666 = vadd.f32 0.0, %v665
    %667 = vmatprep.mubr.bf16.mxu0 0
    %668 = vmatmul.mubr.bf16.gmra.mrb[0].mxu0 %v184
    %v669 = vpop.f32.mrb[0].mxu0
    %v670 = vadd.f32 0.0, %v669
    %v671 = vpop.f32.mrb[0].mxu0
    %v672 = vadd.f32 0.0, %v671
    %v673 = vpop.f32.mrb[0].mxu0
    %v674 = vadd.f32 0.0, %v673
    %v675 = vpop.f32.mrb[0].mxu0
    %v676 = vadd.f32 0.0, %v675
    %677 = vmatprep.mubr.bf16.mxu0 0
    %678 = vmatmul.mubr.bf16.gmra.mrb[0].mxu0 %v185
    %v679 = vpop.f32.mrb[0].mxu0
    %v680 = vadd.f32 0.0, %v679
    %v681 = vpop.f32.mrb[0].mxu0
    %v682 = vadd.f32 0.0, %v681
    %v683 = vpop.f32.mrb[0].mxu0
    %v684 = vadd.f32 0.0, %v683
    %v685 = vpop.f32.mrb[0].mxu0
    %v686 = vadd.f32 0.0, %v685
    %687 = vmatprep.mubr.bf16.mxu0 0
    %688 = vmatmul.mubr.bf16.gmra.mrb[0].mxu0 %v186
    %v689 = vpop.f32.mrb[0].mxu0
    %v690 = vadd.f32 0.0, %v689
    %v691 = vpop.f32.mrb[0].mxu0
    %v692 = vadd.f32 0.0, %v691
    %v693 = vpop.f32.mrb[0].mxu0
    %v694 = vadd.f32 0.0, %v693
    %v695 = vpop.f32.mrb[0].mxu0
    %v696 = vadd.f32 0.0, %v695
    %697 = vmatprep.mubr.bf16.mxu0 0
    %698 = vmatmul.mubr.bf16.gmra.mrb[0].mxu0 %v187
    %v699 = vpop.f32.mrb[0].mxu0
    %v700 = vadd.f32 0.0, %v699
    %v701 = vpop.f32.mrb[0].mxu0
    %v702 = vadd.f32 0.0, %v701
    %v703 = vpop.f32.mrb[0].mxu0
    %v704 = vadd.f32 0.0, %v703
    %v705 = vpop.f32.mrb[0].mxu0
    %v706 = vadd.f32 0.0, %v705
    %707 = vmatprep.mubr.bf16.mxu0 0
    %708 = vmatmul.mubr.bf16.gmra.mrb[0].mxu0 %v188
    %v709 = vpop.f32.mrb[0].mxu0
    %v710 = vadd.f32 0.0, %v709
    %v711 = vpop.f32.mrb[0].mxu0
    %v712 = vadd.f32 0.0, %v711
    %v713 = vpop.f32.mrb[0].mxu0
    %v714 = vadd.f32 0.0, %v713
    %v715 = vpop.f32.mrb[0].mxu0
    %v716 = vadd.f32 0.0, %v715
    %717 = vmatprep.mubr.bf16.mxu0 0
    %718 = vmatmul.mubr.bf16.gmra.mrb[0].mxu0 %v189
    %v719 = vpop.f32.mrb[0].mxu0
    %v720 = vadd.f32 0.0, %v719
    %v721 = vpop.f32.mrb[0].mxu0
    %v722 = vadd.f32 0.0, %v721
    %v723 = vpop.f32.mrb[0].mxu0
    %v724 = vadd.f32 0.0, %v723
    %v725 = vpop.f32.mrb[0].mxu0
    %v726 = vadd.f32 0.0, %v725
    %727 = vmatprep.mubr.bf16.mxu0 0
    %728 = vmatmul.mubr.bf16.gmra.mrb[0].mxu0 %v190
    %v729 = vpop.f32.mrb[0].mxu0
    %v730 = vadd.f32 0.0, %v729
    %v731 = vpop.f32.mrb[0].mxu0
    %v732 = vadd.f32 0.0, %v731
    %v733 = vpop.f32.mrb[0].mxu0
    %v734 = vadd.f32 0.0, %v733
    %v735 = vpop.f32.mrb[0].mxu0
    %v736 = vadd.f32 0.0, %v735
    %737 = vmatprep.mubr.bf16.mxu0 0
    %738 = vmatmul.mubr.bf16.gmra.mrb[0].mxu0 %v191
    %v739 = vpop.f32.mrb[0].mxu0
    %v740 = vadd.f32 0.0, %v739
    %v741 = vpop.f32.mrb[0].mxu0
    %v742 = vadd.f32 0.0, %v741
    %v743 = vpop.f32.mrb[0].mxu0
    %v744 = vadd.f32 0.0, %v743
    %v745 = vpop.f32.mrb[0].mxu0
    %v746 = vadd.f32 0.0, %v745
    %747 = vmatprep.mubr.bf16.mxu0 0
    %748 = vmatmul.mubr.bf16.gmra.mrb[0].mxu0 %v192
    %v749 = vpop.f32.mrb[0].mxu0
    %v750 = vadd.f32 0.0, %v749
    %v751 = vpop.f32.mrb[0].mxu0
    %v752 = vadd.f32 0.0, %v751
    %v753 = vpop.f32.mrb[0].mxu0
    %v754 = vadd.f32 0.0, %v753
    %v755 = vpop.f32.mrb[0].mxu0
    %v756 = vadd.f32 0.0, %v755
    %757 = vmatprep.mubr.bf16.mxu0 0
    %758 = vmatmul.mubr.bf16.gmra.mrb[0].mxu0 %v193
    %v759 = vpop.f32.mrb[0].mxu0
    %v760 = vadd.f32 0.0, %v759
    %v761 = vpop.f32.mrb[0].mxu0
    %v762 = vadd.f32 0.0, %v761
    %v763 = vpop.f32.mrb[0].mxu0
    %v764 = vadd.f32 0.0, %v763
    %v765 = vpop.f32.mrb[0].mxu0
    %v766 = vadd.f32 0.0, %v765
    %767 = vmatprep.mubr.bf16.mxu0 0
    %768 = vmatmul.mubr.bf16.gmra.mrb[0].mxu0 %v194
    %v769 = vpop.f32.mrb[0].mxu0
    %v770 = vadd.f32 0.0, %v769
    %v771 = vpop.f32.mrb[0].mxu0
    %v772 = vadd.f32 0.0, %v771
    %v773 = vpop.f32.mrb[0].mxu0
    %v774 = vadd.f32 0.0, %v773
    %v775 = vpop.f32.mrb[0].mxu0
    %v776 = vadd.f32 0.0, %v775
    %777 = vmatprep.mubr.bf16.mxu0 0
    %778 = vmatmul.mubr.bf16.gmra.mrb[0].mxu0 %v195
    %v779 = vpop.f32.mrb[0].mxu0
    %v780 = vadd.f32 0.0, %v779
    %v781 = vpop.f32.mrb[0].mxu0
    %v782 = vadd.f32 0.0, %v781
    %v783 = vpop.f32.mrb[0].mxu0
    %v784 = vadd.f32 0.0, %v783
    %v785 = vpop.f32.mrb[0].mxu0
    %v786 = vadd.f32 0.0, %v785
    %787 = vmatprep.mubr.bf16.mxu0 0
    %788 = vmatmul.mubr.bf16.gmra.mrb[0].mxu0 %v196
    %v789 = vpop.f32.mrb[0].mxu0
    %v790 = vadd.f32 0.0, %v789
    %v791 = vpop.f32.mrb[0].mxu0
    %v792 = vadd.f32 0.0, %v791
    %v793 = vpop.f32.mrb[0].mxu0
    %v794 = vadd.f32 0.0, %v793
    %v795 = vpop.f32.mrb[0].mxu0
    %v796 = vadd.f32 0.0, %v795
    %797 = vmatprep.mubr.bf16.mxu0 0
    %798 = vmatmul.mubr.bf16.gmra.mrb[0].mxu0 %v197
    %v799 = vpop.f32.mrb[0].mxu0
    %v800 = vadd.f32 0.0, %v799
    %v801 = vpop.f32.mrb[0].mxu0
    %v802 = vadd.f32 0.0, %v801
    %v803 = vpop.f32.mrb[0].mxu0
    %v804 = vadd.f32 0.0, %v803
    %v805 = vpop.f32.mrb[0].mxu0
    %v806 = vadd.f32 0.0, %v805
    %807 = vdwg.mxu0
    %808 = vmatprep.subr.bf16.mxu0 0
    %809 = vmatpush1.bf16.msra.mxu0 %v569
    %810 = vmatprep.subr.bf16.mxu0 0
    %811 = vmatpush1.bf16.msra.mxu0 %v572
    %812 = vmatprep.subr.bf16.mxu0 0
    %813 = vmatpush1.bf16.msra.mxu0 %v575
    %814 = vmatprep.subr.bf16.mxu0 0
    %815 = vmatpush1.bf16.msra.mxu0 %v578
    %816 = vmatprep.subr.bf16.mxu0 0
    %817 = vmatpush1.bf16.msra.mxu0 %v581
    %818 = vmatprep.subr.bf16.mxu0 0
    %819 = vmatpush1.bf16.msra.mxu0 %v584
    %820 = vmatprep.subr.bf16.mxu0 0
    %821 = vmatpush1.bf16.msra.mxu0 %v587
    %822 = vmatprep.subr.bf16.mxu0 0
    %823 = vmatpush1.bf16.msra.mxu0 %v590
    %824 = vmatprep.subr.bf16.mxu0 0
    %825 = vmatpush1.bf16.msra.mxu0 0
    %826 = vmatprep.subr.bf16.mxu0 0
    %827 = vmatpush1.bf16.msra.mxu0 0
    %828 = vmatprep.subr.bf16.mxu0 0
    %829 = vmatpush1.bf16.msra.mxu0 0
    %830 = vmatprep.subr.bf16.mxu0 0
    %831 = vmatpush1.bf16.msra.mxu0 0
    %832 = vmatprep.subr.bf16.mxu0 0
    %833 = vmatpush1.bf16.msra.mxu0 0
    %834 = vmatprep.subr.bf16.mxu0 0
    %835 = vmatpush1.bf16.msra.mxu0 0
    %836 = vmatprep.subr.bf16.mxu0 0
    %837 = vmatpush1.bf16.msra.mxu0 0
    %838 = vmatprep.subr.bf16.mxu0 0
    %839 = vmatpush1.bf16.msra.mxu0 0
    %840 = vmatprep.mubr.bf16.mxu0 0
    %841 = vmatmul.mubr.bf16.gmra.mrb[0].mxu0 %v182
    %v842 = vpop.f32.mrb[0].mxu0
    %v843 = vadd.f32 0.0, %v842
    %v844 = vpop.f32.mrb[0].mxu0
    %v845 = vpop.f32.mrb[0].mxu0
    %v846 = vadd.f32 0.0, %v845
    %v847 = vpop.f32.mrb[0].mxu0
    %848 = vmatprep.mubr.bf16.mxu0 0
    %849 = vmatmul.mubr.bf16.gmra.mrb[0].mxu0 %v183
    %v850 = vpop.f32.mrb[0].mxu0
    %v851 = vadd.f32 0.0, %v850
    %v852 = vpop.f32.mrb[0].mxu0
    %v853 = vpop.f32.mrb[0].mxu0
    %v854 = vadd.f32 0.0, %v853
    %v855 = vpop.f32.mrb[0].mxu0
    %856 = vmatprep.mubr.bf16.mxu0 0
    %857 = vmatmul.mubr.bf16.gmra.mrb[0].mxu0 %v184
    %v858 = vpop.f32.mrb[0].mxu0
    %v859 = vadd.f32 0.0, %v858
    %v860 = vpop.f32.mrb[0].mxu0
    %v861 = vpop.f32.mrb[0].mxu0
    %v862 = vadd.f32 0.0, %v861
    %v863 = vpop.f32.mrb[0].mxu0
    %864 = vmatprep.mubr.bf16.mxu0 0
    %865 = vmatmul.mubr.bf16.gmra.mrb[0].mxu0 %v185
    %v866 = vpop.f32.mrb[0].mxu0
    %v867 = vadd.f32 0.0, %v866
    %v868 = vpop.f32.mrb[0].mxu0
    %v869 = vpop.f32.mrb[0].mxu0
    %v870 = vadd.f32 0.0, %v869
    %v871 = vpop.f32.mrb[0].mxu0
    %872 = vmatprep.mubr.bf16.mxu0 0
    %873 = vmatmul.mubr.bf16.gmra.mrb[0].mxu0 %v186
    %v874 = vpop.f32.mrb[0].mxu0
    %v875 = vadd.f32 0.0, %v874
    %v876 = vpop.f32.mrb[0].mxu0
    %v877 = vpop.f32.mrb[0].mxu0
    %v878 = vadd.f32 0.0, %v877
    %v879 = vpop.f32.mrb[0].mxu0
    %880 = vmatprep.mubr.bf16.mxu0 0
    %881 = vmatmul.mubr.bf16.gmra.mrb[0].mxu0 %v187
    %v882 = vpop.f32.mrb[0].mxu0
    %v883 = vadd.f32 0.0, %v882
    %v884 = vpop.f32.mrb[0].mxu0
    %v885 = vpop.f32.mrb[0].mxu0
    %v886 = vadd.f32 0.0, %v885
    %v887 = vpop.f32.mrb[0].mxu0
    %888 = vmatprep.mubr.bf16.mxu0 0
    %889 = vmatmul.mubr.bf16.gmra.mrb[0].mxu0 %v188
    %v890 = vpop.f32.mrb[0].mxu0
    %v891 = vadd.f32 0.0, %v890
    %v892 = vpop.f32.mrb[0].mxu0
    %v893 = vpop.f32.mrb[0].mxu0
    %v894 = vadd.f32 0.0, %v893
    %v895 = vpop.f32.mrb[0].mxu0
    %896 = vmatprep.mubr.bf16.mxu0 0
    %897 = vmatmul.mubr.bf16.gmra.mrb[0].mxu0 %v189
    %v898 = vpop.f32.mrb[0].mxu0
    %v899 = vadd.f32 0.0, %v898
    %v900 = vpop.f32.mrb[0].mxu0
    %v901 = vpop.f32.mrb[0].mxu0
    %v902 = vadd.f32 0.0, %v901
    %v903 = vpop.f32.mrb[0].mxu0
    %904 = vmatprep.mubr.bf16.mxu0 0
    %905 = vmatmul.mubr.bf16.gmra.mrb[0].mxu0 %v190
    %v906 = vpop.f32.mrb[0].mxu0
    %v907 = vadd.f32 0.0, %v906
    %v908 = vpop.f32.mrb[0].mxu0
    %v909 = vpop.f32.mrb[0].mxu0
    %v910 = vadd.f32 0.0, %v909
    %v911 = vpop.f32.mrb[0].mxu0
    %912 = vmatprep.mubr.bf16.mxu0 0
    %913 = vmatmul.mubr.bf16.gmra.mrb[0].mxu0 %v191
    %v914 = vpop.f32.mrb[0].mxu0
    %v915 = vadd.f32 0.0, %v914
    %v916 = vpop.f32.mrb[0].mxu0
    %v917 = vpop.f32.mrb[0].mxu0
    %v918 = vadd.f32 0.0, %v917
    %v919 = vpop.f32.mrb[0].mxu0
    %920 = vmatprep.mubr.bf16.mxu0 0
    %921 = vmatmul.mubr.bf16.gmra.mrb[0].mxu0 %v192
    %v922 = vpop.f32.mrb[0].mxu0
    %v923 = vadd.f32 0.0, %v922
    %v924 = vpop.f32.mrb[0].mxu0
    %v925 = vpop.f32.mrb[0].mxu0
    %v926 = vadd.f32 0.0, %v925
    %v927 = vpop.f32.mrb[0].mxu0
    %928 = vmatprep.mubr.bf16.mxu0 0
    %929 = vmatmul.mubr.bf16.gmra.mrb[0].mxu0 %v193
    %v930 = vpop.f32.mrb[0].mxu0
    %v931 = vadd.f32 0.0, %v930
    %v932 = vpop.f32.mrb[0].mxu0
    %v933 = vpop.f32.mrb[0].mxu0
    %v934 = vadd.f32 0.0, %v933
    %v935 = vpop.f32.mrb[0].mxu0
    %936 = vmatprep.mubr.bf16.mxu0 0
    %937 = vmatmul.mubr.bf16.gmra.mrb[0].mxu0 %v194
    %v938 = vpop.f32.mrb[0].mxu0
    %v939 = vadd.f32 0.0, %v938
    %v940 = vpop.f32.mrb[0].mxu0
    %v941 = vpop.f32.mrb[0].mxu0
    %v942 = vadd.f32 0.0, %v941
    %v943 = vpop.f32.mrb[0].mxu0
    %944 = vmatprep.mubr.bf16.mxu0 0
    %945 = vmatmul.mubr.bf16.gmra.mrb[0].mxu0 %v195
    %v946 = vpop.f32.mrb[0].mxu0
    %v947 = vadd.f32 0.0, %v946
    %v948 = vpop.f32.mrb[0].mxu0
    %v949 = vpop.f32.mrb[0].mxu0
    %v950 = vadd.f32 0.0, %v949
    %v951 = vpop.f32.mrb[0].mxu0
    %952 = vmatprep.mubr.bf16.mxu0 0
    %953 = vmatmul.mubr.bf16.gmra.mrb[0].mxu0 %v196
    %v954 = vpop.f32.mrb[0].mxu0
    %v955 = vadd.f32 0.0, %v954
    %v956 = vpop.f32.mrb[0].mxu0
    %v957 = vpop.f32.mrb[0].mxu0
    %v958 = vadd.f32 0.0, %v957
    %v959 = vpop.f32.mrb[0].mxu0
    %960 = vmatprep.mubr.bf16.mxu0 0
    %961 = vmatmul.mubr.bf16.gmra.mrb[0].mxu0 %v197
    %v962 = vpop.f32.mrb[0].mxu0
    %v963 = vadd.f32 0.0, %v962
    %v964 = vpop.f32.mrb[0].mxu0
    %v965 = vpop.f32.mrb[0].mxu0
    %v966 = vadd.f32 0.0, %v965
    %v967 = vpop.f32.mrb[0].mxu0
    %968 = vdwg.mxu0
    %v969 = vpack.c.bf16 %v654, %v650
    %v970 = vpack.c.bf16 %v656, %v652
    %v971 = vpack.c.bf16 %v846, %v843
    %v972 = vpack.c.bf16 %v664, %v660
    %v973 = vpack.c.bf16 %v666, %v662
    %v974 = vpack.c.bf16 %v854, %v851
    %v975 = vpack.c.bf16 %v674, %v670
    %v976 = vpack.c.bf16 %v676, %v672
    %v977 = vpack.c.bf16 %v862, %v859
    %v978 = vpack.c.bf16 %v684, %v680
    %v979 = vpack.c.bf16 %v686, %v682
    %v980 = vpack.c.bf16 %v870, %v867
    %v981 = vpack.c.bf16 %v694, %v690
    %v982 = vpack.c.bf16 %v696, %v692
    %v983 = vpack.c.bf16 %v878, %v875
    %v984 = vpack.c.bf16 %v704, %v700
    %v985 = vpack.c.bf16 %v706, %v702
    %v986 = vpack.c.bf16 %v886, %v883
    %v987 = vpack.c.bf16 %v714, %v710
    %v988 = vpack.c.bf16 %v716, %v712
    %v989 = vpack.c.bf16 %v894, %v891
    %v990 = vpack.c.bf16 %v724, %v720
    %v991 = vpack.c.bf16 %v726, %v722
    %v992 = vpack.c.bf16 %v902, %v899
    %v993 = vpack.c.bf16 %v734, %v730
    %v994 = vpack.c.bf16 %v736, %v732
    %v995 = vpack.c.bf16 %v910, %v907
    %v996 = vpack.c.bf16 %v744, %v740
    %v997 = vpack.c.bf16 %v746, %v742
    %v998 = vpack.c.bf16 %v918, %v915
    %v999 = vpack.c.bf16 %v754, %v750
    %v1000 = vpack.c.bf16 %v756, %v752
    %v1001 = vpack.c.bf16 %v926, %v923
    %v1002 = vpack.c.bf16 %v764, %v760
    %v1003 = vpack.c.bf16 %v766, %v762
    %v1004 = vpack.c.bf16 %v934, %v931
    %v1005 = vpack.c.bf16 %v774, %v770
    %v1006 = vpack.c.bf16 %v776, %v772
    %v1007 = vpack.c.bf16 %v942, %v939
    %v1008 = vpack.c.bf16 %v784, %v780
    %v1009 = vpack.c.bf16 %v786, %v782
    %v1010 = vpack.c.bf16 %v950, %v947
    %v1011 = vpack.c.bf16 %v794, %v790
    %v1012 = vpack.c.bf16 %v796, %v792
    %v1013 = vpack.c.bf16 %v958, %v955
    %v1014 = vpack.c.bf16 %v804, %v800
    %v1015 = vpack.c.bf16 %v806, %v802
    %v1016 = vpack.c.bf16 %v966, %v963
    %v1033 = vunpack.c.l.b16 %v969
    %v1034 = vunpack.c.h.b16 %v969
    %v1035 = vunpack.c.l.b16 %v972
    %v1036 = vunpack.c.h.b16 %v972
    %v1037 = vunpack.c.l.b16 %v975
    %v1038 = vunpack.c.h.b16 %v975
    %v1039 = vunpack.c.l.b16 %v978
    %v1040 = vunpack.c.h.b16 %v978
    %v1041 = vunpack.c.l.b16 %v981
    %v1042 = vunpack.c.h.b16 %v981
    %v1043 = vunpack.c.l.b16 %v984
    %v1044 = vunpack.c.h.b16 %v984
    %v1045 = vunpack.c.l.b16 %v987
    %v1046 = vunpack.c.h.b16 %v987
    %v1047 = vunpack.c.l.b16 %v990
    %v1048 = vunpack.c.h.b16 %v990
    %v1049 = vunpack.c.l.b16 %v993
    %v1050 = vunpack.c.h.b16 %v993
    %v1051 = vunpack.c.l.b16 %v996
    %v1052 = vunpack.c.h.b16 %v996
    %v1053 = vunpack.c.l.b16 %v999
    %v1054 = vunpack.c.h.b16 %v999
    %v1055 = vunpack.c.l.b16 %v1002
    %v1056 = vunpack.c.h.b16 %v1002
    %v1057 = vunpack.c.l.b16 %v1005
    %v1058 = vunpack.c.h.b16 %v1005
    %v1059 = vunpack.c.l.b16 %v1008
    %v1060 = vunpack.c.h.b16 %v1008
    %v1061 = vunpack.c.l.b16 %v1011
    %v1062 = vunpack.c.h.b16 %v1011
    %v1063 = vunpack.c.l.b16 %v1014
    %v1064 = vunpack.c.h.b16 %v1014
    %v1065 = vpack.c.b16 %v1033, %v1033
    %v1066 = vpack.c.b16 %v1034, %v1034
    %v1067 = vpack.c.b16 %v1035, %v1035
    %v1068 = vpack.c.b16 %v1036, %v1036
    %v1069 = vpack.c.b16 %v1037, %v1037
    %v1070 = vpack.c.b16 %v1038, %v1038
    %v1071 = vpack.c.b16 %v1039, %v1039
    %v1072 = vpack.c.b16 %v1040, %v1040
    %v1073 = vpack.c.b16 %v1041, %v1041
    %v1074 = vpack.c.b16 %v1042, %v1042
    %v1075 = vpack.c.b16 %v1043, %v1043
    %v1076 = vpack.c.b16 %v1044, %v1044
    %v1077 = vpack.c.b16 %v1045, %v1045
    %v1078 = vpack.c.b16 %v1046, %v1046
    %v1079 = vpack.c.b16 %v1047, %v1047
    %v1080 = vpack.c.b16 %v1048, %v1048
    %v1081 = vpack.c.b16 %v1049, %v1049
    %v1082 = vpack.c.b16 %v1050, %v1050
    %v1083 = vpack.c.b16 %v1051, %v1051
    %v1084 = vpack.c.b16 %v1052, %v1052
    %v1085 = vpack.c.b16 %v1053, %v1053
    %v1086 = vpack.c.b16 %v1054, %v1054
    %v1087 = vpack.c.b16 %v1055, %v1055
    %v1088 = vpack.c.b16 %v1056, %v1056
    %v1089 = vpack.c.b16 %v1057, %v1057
    %v1090 = vpack.c.b16 %v1058, %v1058
    %v1091 = vpack.c.b16 %v1059, %v1059
    %v1092 = vpack.c.b16 %v1060, %v1060
    %v1093 = vpack.c.b16 %v1061, %v1061
    %v1094 = vpack.c.b16 %v1062, %v1062
    %v1095 = vpack.c.b16 %v1063, %v1063
    %v1096 = vpack.c.b16 %v1064, %v1064
    %1129 = vst [vmem:[#allocation9] sm:$0xf] %v1065
    %1130 = vst [vmem:[#allocation9 + $0x4] sm:$0xf] %v1066
    %1131 = vst [vmem:[#allocation9 + $0x8] sm:$0xf] %v1067
    %1132 = vst [vmem:[#allocation9 + $0xc] sm:$0xf] %v1068
    %1133 = vst [vmem:[#allocation9 + $0x10] sm:$0xf] %v1069
    %1134 = vst [vmem:[#allocation9 + $0x14] sm:$0xf] %v1070
    %1135 = vst [vmem:[#allocation9 + $0x18] sm:$0xf] %v1071
    %1136 = vst [vmem:[#allocation9 + $0x1c] sm:$0xf] %v1072
    %1137 = vst [vmem:[#allocation9 + $0x20] sm:$0xf] %v1073
    %1138 = vst [vmem:[#allocation9 + $0x24] sm:$0xf] %v1074
    %1139 = vst [vmem:[#allocation9 + $0x28] sm:$0xf] %v1075
    %1140 = vst [vmem:[#allocation9 + $0x2c] sm:$0xf] %v1076
    %1141 = vst [vmem:[#allocation9 + $0x30] sm:$0xf] %v1077
    %1142 = vst [vmem:[#allocation9 + $0x34] sm:$0xf] %v1078
    %1143 = vst [vmem:[#allocation9 + $0x38] sm:$0xf] %v1079
    %1144 = vst [vmem:[#allocation9 + $0x3c] sm:$0xf] %v1080
    %1145 = vst [vmem:[#allocation9 + $0x40] sm:$0xf] %v1081
    %1146 = vst [vmem:[#allocation9 + $0x44] sm:$0xf] %v1082
    %1147 = vst [vmem:[#allocation9 + $0x48] sm:$0xf] %v1083
    %1148 = vst [vmem:[#allocation9 + $0x4c] sm:$0xf] %v1084
    %1149 = vst [vmem:[#allocation9 + $0x50] sm:$0xf] %v1085
    %1150 = vst [vmem:[#allocation9 + $0x54] sm:$0xf] %v1086
    %1151 = vst [vmem:[#allocation9 + $0x58] sm:$0xf] %v1087
    %1152 = vst [vmem:[#allocation9 + $0x5c] sm:$0xf] %v1088
    %1153 = vst [vmem:[#allocation9 + $0x60] sm:$0xf] %v1089
    %1154 = vst [vmem:[#allocation9 + $0x64] sm:$0xf] %v1090
    %1155 = vst [vmem:[#allocation9 + $0x68] sm:$0xf] %v1091
    %1156 = vst [vmem:[#allocation9 + $0x6c] sm:$0xf] %v1092
    %1157 = vst [vmem:[#allocation9 + $0x70] sm:$0xf] %v1093
    %1158 = vst [vmem:[#allocation9 + $0x74] sm:$0xf] %v1094
    %1159 = vst [vmem:[#allocation9 + $0x78] sm:$0xf] %v1095
    %1160 = vst [vmem:[#allocation9 + $0x7c] sm:$0xf] %v1096
    %v1177 = vunpack.c.l.b16 %v970
    %v1178 = vunpack.c.h.b16 %v970
    %v1179 = vunpack.c.l.b16 %v973
    %v1180 = vunpack.c.h.b16 %v973
    %v1181 = vunpack.c.l.b16 %v976
    %v1182 = vunpack.c.h.b16 %v976
    %v1183 = vunpack.c.l.b16 %v979
    %v1184 = vunpack.c.h.b16 %v979
    %v1185 = vunpack.c.l.b16 %v982
    %v1186 = vunpack.c.h.b16 %v982
    %v1187 = vunpack.c.l.b16 %v985
    %v1188 = vunpack.c.h.b16 %v985
    %v1189 = vunpack.c.l.b16 %v988
    %v1190 = vunpack.c.h.b16 %v988
    %v1191 = vunpack.c.l.b16 %v991
    %v1192 = vunpack.c.h.b16 %v991
    %v1193 = vunpack.c.l.b16 %v994
    %v1194 = vunpack.c.h.b16 %v994
    %v1195 = vunpack.c.l.b16 %v997
    %v1196 = vunpack.c.h.b16 %v997
    %v1197 = vunpack.c.l.b16 %v1000
    %v1198 = vunpack.c.h.b16 %v1000
    %v1199 = vunpack.c.l.b16 %v1003
    %v1200 = vunpack.c.h.b16 %v1003
    %v1201 = vunpack.c.l.b16 %v1006
    %v1202 = vunpack.c.h.b16 %v1006
    %v1203 = vunpack.c.l.b16 %v1009
    %v1204 = vunpack.c.h.b16 %v1009
    %v1205 = vunpack.c.l.b16 %v1012
    %v1206 = vunpack.c.h.b16 %v1012
    %v1207 = vunpack.c.l.b16 %v1015
    %v1208 = vunpack.c.h.b16 %v1015
    %v1209 = vpack.c.b16 %v1177, %v1177
    %v1210 = vpack.c.b16 %v1178, %v1178
    %v1211 = vpack.c.b16 %v1179, %v1179
    %v1212 = vpack.c.b16 %v1180, %v1180
    %v1213 = vpack.c.b16 %v1181, %v1181
    %v1214 = vpack.c.b16 %v1182, %v1182
    %v1215 = vpack.c.b16 %v1183, %v1183
    %v1216 = vpack.c.b16 %v1184, %v1184
    %v1217 = vpack.c.b16 %v1185, %v1185
    %v1218 = vpack.c.b16 %v1186, %v1186
    %v1219 = vpack.c.b16 %v1187, %v1187
    %v1220 = vpack.c.b16 %v1188, %v1188
    %v1221 = vpack.c.b16 %v1189, %v1189
    %v1222 = vpack.c.b16 %v1190, %v1190
    %v1223 = vpack.c.b16 %v1191, %v1191
    %v1224 = vpack.c.b16 %v1192, %v1192
    %v1225 = vpack.c.b16 %v1193, %v1193
    %v1226 = vpack.c.b16 %v1194, %v1194
    %v1227 = vpack.c.b16 %v1195, %v1195
    %v1228 = vpack.c.b16 %v1196, %v1196
    %v1229 = vpack.c.b16 %v1197, %v1197
    %v1230 = vpack.c.b16 %v1198, %v1198
    %v1231 = vpack.c.b16 %v1199, %v1199
    %v1232 = vpack.c.b16 %v1200, %v1200
    %v1233 = vpack.c.b16 %v1201, %v1201
    %v1234 = vpack.c.b16 %v1202, %v1202
    %v1235 = vpack.c.b16 %v1203, %v1203
    %v1236 = vpack.c.b16 %v1204, %v1204
    %v1237 = vpack.c.b16 %v1205, %v1205
    %v1238 = vpack.c.b16 %v1206, %v1206
    %v1239 = vpack.c.b16 %v1207, %v1207
    %v1240 = vpack.c.b16 %v1208, %v1208
    %s1273 = scalar_lea.vmem [#allocation9], 128
    %1274 = vst [vmem:[%s1273] sm:$0xf] %v1209
    %1275 = vst [vmem:[%s1273 + $0x4] sm:$0xf] %v1210
    %1276 = vst [vmem:[%s1273 + $0x8] sm:$0xf] %v1211
    %1277 = vst [vmem:[%s1273 + $0xc] sm:$0xf] %v1212
    %1278 = vst [vmem:[%s1273 + $0x10] sm:$0xf] %v1213
    %1279 = vst [vmem:[%s1273 + $0x14] sm:$0xf] %v1214
    %1280 = vst [vmem:[%s1273 + $0x18] sm:$0xf] %v1215
    %1281 = vst [vmem:[%s1273 + $0x1c] sm:$0xf] %v1216
    %1282 = vst [vmem:[%s1273 + $0x20] sm:$0xf] %v1217
    %1283 = vst [vmem:[%s1273 + $0x24] sm:$0xf] %v1218
    %1284 = vst [vmem:[%s1273 + $0x28] sm:$0xf] %v1219
    %1285 = vst [vmem:[%s1273 + $0x2c] sm:$0xf] %v1220
    %1286 = vst [vmem:[%s1273 + $0x30] sm:$0xf] %v1221
    %1287 = vst [vmem:[%s1273 + $0x34] sm:$0xf] %v1222
    %1288 = vst [vmem:[%s1273 + $0x38] sm:$0xf] %v1223
    %1289 = vst [vmem:[%s1273 + $0x3c] sm:$0xf] %v1224
    %1290 = vst [vmem:[%s1273 + $0x40] sm:$0xf] %v1225
    %1291 = vst [vmem:[%s1273 + $0x44] sm:$0xf] %v1226
    %1292 = vst [vmem:[%s1273 + $0x48] sm:$0xf] %v1227
    %1293 = vst [vmem:[%s1273 + $0x4c] sm:$0xf] %v1228
    %1294 = vst [vmem:[%s1273 + $0x50] sm:$0xf] %v1229
    %1295 = vst [vmem:[%s1273 + $0x54] sm:$0xf] %v1230
    %1296 = vst [vmem:[%s1273 + $0x58] sm:$0xf] %v1231
    %1297 = vst [vmem:[%s1273 + $0x5c] sm:$0xf] %v1232
    %1298 = vst [vmem:[%s1273 + $0x60] sm:$0xf] %v1233
    %1299 = vst [vmem:[%s1273 + $0x64] sm:$0xf] %v1234
    %1300 = vst [vmem:[%s1273 + $0x68] sm:$0xf] %v1235
    %1301 = vst [vmem:[%s1273 + $0x6c] sm:$0xf] %v1236
    %1302 = vst [vmem:[%s1273 + $0x70] sm:$0xf] %v1237
    %1303 = vst [vmem:[%s1273 + $0x74] sm:$0xf] %v1238
    %1304 = vst [vmem:[%s1273 + $0x78] sm:$0xf] %v1239
    %1305 = vst [vmem:[%s1273 + $0x7c] sm:$0xf] %v1240
    %v1322 = vunpack.c.l.b16 %v971
    %v1323 = vunpack.c.h.b16 %v971
    %v1324 = vunpack.c.l.b16 %v974
    %v1325 = vunpack.c.h.b16 %v974
    %v1326 = vunpack.c.l.b16 %v977
    %v1327 = vunpack.c.h.b16 %v977
    %v1328 = vunpack.c.l.b16 %v980
    %v1329 = vunpack.c.h.b16 %v980
    %v1330 = vunpack.c.l.b16 %v983
    %v1331 = vunpack.c.h.b16 %v983
    %v1332 = vunpack.c.l.b16 %v986
    %v1333 = vunpack.c.h.b16 %v986
    %v1334 = vunpack.c.l.b16 %v989
    %v1335 = vunpack.c.h.b16 %v989
    %v1336 = vunpack.c.l.b16 %v992
    %v1337 = vunpack.c.h.b16 %v992
    %v1338 = vunpack.c.l.b16 %v995
    %v1339 = vunpack.c.h.b16 %v995
    %v1340 = vunpack.c.l.b16 %v998
    %v1341 = vunpack.c.h.b16 %v998
    %v1342 = vunpack.c.l.b16 %v1001
    %v1343 = vunpack.c.h.b16 %v1001
    %v1344 = vunpack.c.l.b16 %v1004
    %v1345 = vunpack.c.h.b16 %v1004
    %v1346 = vunpack.c.l.b16 %v1007
    %v1347 = vunpack.c.h.b16 %v1007
    %v1348 = vunpack.c.l.b16 %v1010
    %v1349 = vunpack.c.h.b16 %v1010
    %v1350 = vunpack.c.l.b16 %v1013
    %v1351 = vunpack.c.h.b16 %v1013
    %v1352 = vunpack.c.l.b16 %v1016
    %v1353 = vunpack.c.h.b16 %v1016
    %v1354 = vpack.c.b16 %v1322, %v1322
    %v1355 = vpack.c.b16 %v1323, %v1323
    %v1356 = vpack.c.b16 %v1324, %v1324
    %v1357 = vpack.c.b16 %v1325, %v1325
    %v1358 = vpack.c.b16 %v1326, %v1326
    %v1359 = vpack.c.b16 %v1327, %v1327
    %v1360 = vpack.c.b16 %v1328, %v1328
    %v1361 = vpack.c.b16 %v1329, %v1329
    %v1362 = vpack.c.b16 %v1330, %v1330
    %v1363 = vpack.c.b16 %v1331, %v1331
    %v1364 = vpack.c.b16 %v1332, %v1332
    %v1365 = vpack.c.b16 %v1333, %v1333
    %v1366 = vpack.c.b16 %v1334, %v1334
    %v1367 = vpack.c.b16 %v1335, %v1335
    %v1368 = vpack.c.b16 %v1336, %v1336
    %v1369 = vpack.c.b16 %v1337, %v1337
    %v1370 = vpack.c.b16 %v1338, %v1338
    %v1371 = vpack.c.b16 %v1339, %v1339
    %v1372 = vpack.c.b16 %v1340, %v1340
    %v1373 = vpack.c.b16 %v1341, %v1341
    %v1374 = vpack.c.b16 %v1342, %v1342
    %v1375 = vpack.c.b16 %v1343, %v1343
    %v1376 = vpack.c.b16 %v1344, %v1344
    %v1377 = vpack.c.b16 %v1345, %v1345
    %v1378 = vpack.c.b16 %v1346, %v1346
    %v1379 = vpack.c.b16 %v1347, %v1347
    %v1380 = vpack.c.b16 %v1348, %v1348
    %v1381 = vpack.c.b16 %v1349, %v1349
    %v1382 = vpack.c.b16 %v1350, %v1350
    %v1383 = vpack.c.b16 %v1351, %v1351
    %v1384 = vpack.c.b16 %v1352, %v1352
    %v1385 = vpack.c.b16 %v1353, %v1353
    %s1418 = scalar_lea.vmem [#allocation9], 256
    %1419 = vst [vmem:[%s1418] sm:$0xf] %v1354
    %1420 = vst [vmem:[%s1418 + $0x4] sm:$0xf] %v1355
    %1421 = vst [vmem:[%s1418 + $0x8] sm:$0xf] %v1356
    %1422 = vst [vmem:[%s1418 + $0xc] sm:$0xf] %v1357
    %1423 = vst [vmem:[%s1418 + $0x10] sm:$0xf] %v1358
    %1424 = vst [vmem:[%s1418 + $0x14] sm:$0xf] %v1359
    %1425 = vst [vmem:[%s1418 + $0x18] sm:$0xf] %v1360
    %1426 = vst [vmem:[%s1418 + $0x1c] sm:$0xf] %v1361
    %1427 = vst [vmem:[%s1418 + $0x20] sm:$0xf] %v1362
    %1428 = vst [vmem:[%s1418 + $0x24] sm:$0xf] %v1363
    %1429 = vst [vmem:[%s1418 + $0x28] sm:$0xf] %v1364
    %1430 = vst [vmem:[%s1418 + $0x2c] sm:$0xf] %v1365
    %1431 = vst [vmem:[%s1418 + $0x30] sm:$0xf] %v1366
    %1432 = vst [vmem:[%s1418 + $0x34] sm:$0xf] %v1367
    %1433 = vst [vmem:[%s1418 + $0x38] sm:$0xf] %v1368
    %1434 = vst [vmem:[%s1418 + $0x3c] sm:$0xf] %v1369
    %1435 = vst [vmem:[%s1418 + $0x40] sm:$0xf] %v1370
    %1436 = vst [vmem:[%s1418 + $0x44] sm:$0xf] %v1371
    %1437 = vst [vmem:[%s1418 + $0x48] sm:$0xf] %v1372
    %1438 = vst [vmem:[%s1418 + $0x4c] sm:$0xf] %v1373
    %1439 = vst [vmem:[%s1418 + $0x50] sm:$0xf] %v1374
    %1440 = vst [vmem:[%s1418 + $0x54] sm:$0xf] %v1375
    %1441 = vst [vmem:[%s1418 + $0x58] sm:$0xf] %v1376
    %1442 = vst [vmem:[%s1418 + $0x5c] sm:$0xf] %v1377
    %1443 = vst [vmem:[%s1418 + $0x60] sm:$0xf] %v1378
    %1444 = vst [vmem:[%s1418 + $0x64] sm:$0xf] %v1379
    %1445 = vst [vmem:[%s1418 + $0x68] sm:$0xf] %v1380
    %1446 = vst [vmem:[%s1418 + $0x6c] sm:$0xf] %v1381
    %1447 = vst [vmem:[%s1418 + $0x70] sm:$0xf] %v1382
    %1448 = vst [vmem:[%s1418 + $0x74] sm:$0xf] %v1383
    %1449 = vst [vmem:[%s1418 + $0x78] sm:$0xf] %v1384
    %1450 = vst [vmem:[%s1418 + $0x7c] sm:$0xf] %v1385
    // Predicated region
    $region30: #{tpu_custom_call.1} parent=1 // pred_check
      _
    $region31: #{tpu_custom_call.1} parent=1 // pred_check_branch
      %1452 = sbr.rel (0) target = $region33
    $region32: #{tpu_custom_call.1} parent=1 // pred_region
      %s1454 = ssub.s32 4096, 4096
      %1455 = vsyncadd [#allocation4], %s1454
      %s1456 = sshll.u32 [#allocation8], 4
      %s1457 = int_to_ptr.vmem [resolvable:$true] %s1456
      %1462 = dma.vmem_to_hbm [thread:$0]  %s1457, 4096, %s4, [#allocation4], 128, 128, 8
    $region33: #{tpu_custom_call.1} parent=1 // pred_fallthru
      _
    // Predicated region
    $region34: #{tpu_custom_call.1} parent=1 // pred_check
      _
    $region35: #{tpu_custom_call.1} parent=1 // pred_check_branch
      %1464 = sbr.rel (0) target = $region37
    $region36: #{tpu_custom_call.1} parent=1 // pred_region
      %s1466 = ssub.s32 6144, 6144
      %1467 = vsyncadd [#allocation10], %s1466
      %s1468 = sshll.u32 [#allocation9], 4
      %s1469 = int_to_ptr.vmem [resolvable:$true] %s1468
      %1474 = dma.vmem_to_hbm [thread:$0]  %s1469, 6144, %s5, [#allocation10], 64, 64, 4
    $region37: #{tpu_custom_call.1} parent=1 // pred_fallthru
      _
    // Predicated region
    $region38: #{tpu_custom_call.1} parent=1 // pred_check
      _
    $region39: #{tpu_custom_call.1} parent=1 // pred_check_branch
      %1476 = sbr.rel (0) target = $region41
    $region40: #{tpu_custom_call.1} parent=1 // pred_region
      %1477 = dma.done [#allocation4], 4096
    $region41: #{tpu_custom_call.1} parent=1 // pred_fallthru
      _
    // Predicated region
    $region42: #{tpu_custom_call.1} parent=1 // pred_check
      _
    $region43: #{tpu_custom_call.1} parent=1 // pred_check_branch
      %1479 = sbr.rel (0) target = $region45
    $region44: #{tpu_custom_call.1} parent=1 // pred_region
      %1480 = dma.done [#allocation10], 6144
    $region45: #{tpu_custom_call.1} parent=1 // pred_fallthru
      _
    %1481 = vsyncpa [#allocation3], 1
    %1482 = vsyncpa [#allocation6], 1
    %1483 = vsyncpa [#allocation4], 1
    %1484 = vsyncpa [#allocation10], 1

</llo_original>
